<compile_context>
chip_gen: v7x
topology: tpu7x:2x2x1
jax: 0.10.0
libtpu: 0.0.40
codegen_flags: <defaults>
</compile_context>

<pallas_src>
import functools

import jax
import jax.numpy as jnp
from jax import lax
from jax.experimental import pallas as pl
from jax.experimental.pallas import tpu as pltpu


# ----------------------------------------------------------------------------
# Small helpers
# ----------------------------------------------------------------------------
def _round_up(x, m):
    return (x + m - 1) // m * m


def _cdiv(a, b):
    return -(-a // b)


def _vmem_limit_bytes():
    """Generation-aware scoped-VMEM limit: ~3/4 of per-core VMEM capacity
    (v7x: 64 MiB -> 48 MiB, v5e/v6e: 128 MiB -> 96 MiB).  Conservative 48 MiB
    fallback if the trace-time query is unavailable."""
    cap = None
    try:
        cap = getattr(pltpu.get_tpu_info(), "vmem_capacity_bytes", None)
    except Exception:
        cap = None
    if not cap:
        cap = 64 << 20
    return int(min(max(cap * 3 // 4, 16 << 20), 100 << 20))


def _choose_row_tile(m_real, k_pad, cout_pad, budget, recompute):
    """Largest row tile whose double-buffered per-step footprint (for BOTH
    kernels of the chosen path) fits the budget."""
    m_cap = _round_up(max(m_real, 8), 8)
    stats_bytes = 2 * 2 * 8 * cout_pad * 4        # two (8, Cout_pad) f32 accumulators

    def fits(tm):
        # kernel 1: patches + weights (+ bf16 y out when not recomputing)
        k1 = 2 * tm * k_pad * 2 + 2 * k_pad * cout_pad * 2 + stats_bytes
        if not recompute:
            k1 += 2 * tm * cout_pad * 2
        # kernel 2
        if recompute:
            k2 = (2 * tm * k_pad * 2 + 2 * k_pad * cout_pad * 2
                  + 2 * tm * cout_pad * 4 + stats_bytes)
        else:
            k2 = 2 * tm * cout_pad * 2 + 2 * tm * cout_pad * 4 + stats_bytes
        return max(k1, k2) <= budget

    if m_cap <= 2048 and fits(m_cap):
        return m_cap                               # single row tile per core
    for tm in (2048, 1024, 512, 256, 128, 64, 32, 16, 8):
        if tm <= m_cap and fits(tm):
            return tm
    return 8


def _im2col_nhwc(x_nhwc, kh, kw, stride, padding):
    """Patch matrix (N*OH*OW, kh*kw*Cin); column order (ki, kj, cin)."""
    n, h, w, c = x_nhwc.shape
    if kh == 1 and kw == 1 and stride == 1 and padding == 0:
        # 1x1 conv: im2col is just a reshape -- no data blow-up, no extra copy.
        return x_nhwc.reshape(n * h * w, c), h, w
    # TODO(synk): for kernel_size > 1 this materializes the kh*kw-times larger
    # im2col matrix in HBM; an implicit-im2col variant (extra tap grid axis with
    # shifted-window index_maps over the padded NHWC input) would avoid that
    # HBM round trip entirely.
    x = jnp.pad(x_nhwc, ((0, 0), (padding, padding), (padding, padding), (0, 0)))
    n, hp, wp, c = x.shape
    oh = (hp - kh) // stride + 1
    ow = (wp - kw) // stride + 1
    cols = []
    for i in range(kh):
        for j in range(kw):
            cols.append(x[:, i:i + stride * oh:stride, j:j + stride * ow:stride, :])
    patches = jnp.concatenate(cols, axis=-1)           # (N, OH, OW, kh*kw*C)
    return patches.reshape(n * oh * ow, kh * kw * c), oh, ow


# ----------------------------------------------------------------------------
# Pallas kernels
# ----------------------------------------------------------------------------
def _accumulate_stats(y, sum_ref, sqsum_ref):
    """Accumulate per-channel sum / sum-of-squares of the f32 conv tile into
    row 0 of this core's (8, Cout_pad) accumulator slot (rows 1..7 stay 0;
    kernel 2 collapses all rows once)."""
    sum_ref[0:1, :] += jnp.sum(y, axis=0, keepdims=True)
    sqsum_ref[0:1, :] += jnp.sum(y * y, axis=0, keepdims=True)


def _conv_stats_kernel(p_ref, w_ref, y_ref, sum_ref, sqsum_ref):
    """Path A (large K): conv-as-matmul for one row tile, store y as bf16,
    accumulate BN statistics from the f32 MXU result while it is in VMEM."""
    @pl.when(pl.program_id(1) == 0)
    def _():
        sum_ref[...] = jnp.zeros_like(sum_ref)
        sqsum_ref[...] = jnp.zeros_like(sqsum_ref)

    y = jnp.dot(p_ref[...], w_ref[...], preferred_element_type=jnp.float32)
    y_ref[...] = y.astype(y_ref.dtype)          # bf16 intermediate: half the HBM bytes
    _accumulate_stats(y, sum_ref, sqsum_ref)


def _stats_only_kernel(p_ref, w_ref, sum_ref, sqsum_ref):
    """Path B (recompute): conv-as-matmul, emit ONLY the BN statistics.
    y is never written to HBM."""
    @pl.when(pl.program_id(1) == 0)
    def _():
        sum_ref[...] = jnp.zeros_like(sum_ref)
        sqsum_ref[...] = jnp.zeros_like(sqsum_ref)

    y = jnp.dot(p_ref[...], w_ref[...], preferred_element_type=jnp.float32)
    _accumulate_stats(y, sum_ref, sqsum_ref)


def _bn_scale_shift(sum_ref, sqsum_ref, gamma_ref, beta_ref, inv_m, eps):
    """Combine the per-core partial accumulators and derive per-channel
    scale/shift (cheap (., Cout_pad) VPU/EUP work, done in-kernel so there are
    no tiny XLA ops between the two pallas_calls)."""
    total = jnp.sum(sum_ref[...], axis=0, keepdims=True)
    total_sq = jnp.sum(sqsum_ref[...], axis=0, keepdims=True)
    mean = total * inv_m
    var = jnp.maximum(total_sq * inv_m - mean * mean, 0.0)   # guard cancellation
    inv_std = lax.rsqrt(var + eps)
    scale = gamma_ref[...] * inv_std
    shift = beta_ref[...] - mean * scale
    return scale, shift


def _bn_apply_kernel(y_ref, sum_ref, sqsum_ref, gamma_ref, beta_ref, o_ref,
                     *, inv_m, eps):
    """Path A kernel 2: normalize the bf16 intermediate, write f32 output."""
    scale, shift = _bn_scale_shift(sum_ref, sqsum_ref, gamma_ref, beta_ref,
                                   inv_m, eps)
    o_ref[...] = y_ref[...].astype(jnp.float32) * scale + shift


def _matmul_bn_kernel(p_ref, w_ref, sum_ref, sqsum_ref, gamma_ref, beta_ref,
                      o_ref, *, inv_m, eps):
    """Path B kernel 2: redo the (cheap) matmul and write the final BN'd
    output directly -- no y intermediate in HBM at all."""
    scale, shift = _bn_scale_shift(sum_ref, sqsum_ref, gamma_ref, beta_ref,
                                   inv_m, eps)
    y = jnp.dot(p_ref[...], w_ref[...], preferred_element_type=jnp.float32)
    o_ref[...] = y * scale + shift


# ----------------------------------------------------------------------------
# Forward wrapper
# ----------------------------------------------------------------------------
def conv_block_forward(x_nchw, params, *, kernel_size=1, stride=1, padding=0,
                       eps=1e-5, row_tile=None):
    """conv_block forward: (N, Cin, H, W) f32 -> (N, Cout, OH, OW) f32.

    NOTE: params["b"] (the conv bias) is intentionally unused -- BatchNorm
    immediately after the conv (batch statistics / training mode) subtracts
    the batch mean, which cancels the bias exactly.
    """
    w, gamma, beta = params["w"], params["gamma"], params["beta"]
    cout, cin, kh, kw = w.shape
    n = x_nchw.shape[0]

    # NCHW -> NHWC, patch matrix.
    x_nhwc = jnp.transpose(x_nchw, (0, 2, 3, 1)).astype(jnp.float32)
    patches, oh, ow = _im2col_nhwc(x_nhwc, kh, kw, stride, padding)
    m_real, k = patches.shape

    # Lane-dense channel axis; K padded to a bf16-friendly multiple (zeros are free).
    cout_pad = _round_up(cout, 128)
    k_pad = _round_up(k, 16)
    if _round_up(k, 128) <= int(k * 1.125):       # full 128-pad only if <~12.5% inflation
        k_pad = _round_up(k, 128)

    # Recompute path when the extra patch read is cheaper than y write+read.
    recompute = (2 * k_pad) <= (4 * cout_pad)

    vmem_limit = _vmem_limit_bytes()
    budget = vmem_limit // 2                      # headroom for f32 temps / scratch
    if row_tile is not None:
        tm = _round_up(min(int(row_tile), _round_up(m_real, 8)), 8)
    else:
        tm = _choose_row_tile(m_real, k_pad, cout_pad, budget, recompute)

    # Row tiles split into (outer "parallel", inner "arbitrary") so v7x can
    # shard the conv+stats kernel across its two TensorCores; each outer slot
    # gets its own stats accumulator block.
    n_tiles = _cdiv(m_real, tm)
    n_outer = 2 if n_tiles >= 2 else 1
    n_inner = _cdiv(n_tiles, n_outer)
    n_tiles_total = n_outer * n_inner
    m_pad = n_tiles_total * tm

    # bf16 MXU inputs (f32 accumulation in-kernel); pad rows / K / channels.
    patches_p = jnp.pad(patches, ((0, m_pad - m_real), (0, k_pad - k))
                        ).astype(jnp.bfloat16)
    w_mat = jnp.transpose(w, (2, 3, 1, 0)).reshape(kh * kw * cin, cout)
    w_mat = jnp.pad(w_mat, ((0, k_pad - k), (0, cout_pad - cout))
                    ).astype(jnp.bfloat16)
    gamma_row = jnp.pad(gamma.astype(jnp.float32),
                        (0, cout_pad - cout)).reshape(1, cout_pad)
    beta_row = jnp.pad(beta.astype(jnp.float32),
                       (0, cout_pad - cout)).reshape(1, cout_pad)

    cp1 = pltpu.CompilerParams(dimension_semantics=("parallel", "arbitrary"),
                               vmem_limit_bytes=vmem_limit)
    cp2 = pltpu.CompilerParams(dimension_semantics=("parallel",),
                               vmem_limit_bytes=vmem_limit)
    inv_m = 1.0 / float(m_real)
    stats_shape = jax.ShapeDtypeStruct((n_outer * 8, cout_pad), jnp.float32)
    stats_spec_k2 = pl.BlockSpec((n_outer * 8, cout_pad), lambda i: (0, 0))
    row_spec = pl.BlockSpec((1, cout_pad), lambda i: (0, 0))

    if recompute:
        # ---- kernel 1: conv matmul -> BN statistics only ---------------------
        ch_sum, ch_sqsum = pl.pallas_call(
            _stats_only_kernel,
            out_shape=(stats_shape, stats_shape),
            grid_spec=pltpu.PrefetchScalarGridSpec(
                num_scalar_prefetch=0,
                grid=(n_outer, n_inner),
                in_specs=[
                    pl.BlockSpec((tm, k_pad), lambda o, i: (o * n_inner + i, 0)),
                    pl.BlockSpec((k_pad, cout_pad), lambda o, i: (0, 0)),
                ],
                out_specs=(
                    pl.BlockSpec((8, cout_pad), lambda o, i: (o, 0)),
                    pl.BlockSpec((8, cout_pad), lambda o, i: (o, 0)),
                ),
            ),
            compiler_params=cp1,
        )(patches_p, w_mat)

        # ---- kernel 2: re-read patches, matmul again, BN apply, final store ---
        y_bn = pl.pallas_call(
            functools.partial(_matmul_bn_kernel, inv_m=inv_m, eps=eps),
            out_shape=jax.ShapeDtypeStruct((m_pad, cout_pad), jnp.float32),
            grid_spec=pltpu.PrefetchScalarGridSpec(
                num_scalar_prefetch=0,
                grid=(n_tiles_total,),
                in_specs=[
                    pl.BlockSpec((tm, k_pad), lambda i: (i, 0)),
                    pl.BlockSpec((k_pad, cout_pad), lambda i: (0, 0)),
                    stats_spec_k2, stats_spec_k2, row_spec, row_spec,
                ],
                out_specs=pl.BlockSpec((tm, cout_pad), lambda i: (i, 0)),
            ),
            compiler_params=cp2,
        )(patches_p, w_mat, ch_sum, ch_sqsum, gamma_row, beta_row)
    else:
        # ---- kernel 1: conv matmul + fused BN statistics, bf16 y intermediate -
        y, ch_sum, ch_sqsum = pl.pallas_call(
            _conv_stats_kernel,
            out_shape=(
                jax.ShapeDtypeStruct((m_pad, cout_pad), jnp.bfloat16),
                stats_shape, stats_shape,
            ),
            grid_spec=pltpu.PrefetchScalarGridSpec(
                num_scalar_prefetch=0,
                grid=(n_outer, n_inner),
                in_specs=[
                    pl.BlockSpec((tm, k_pad), lambda o, i: (o * n_inner + i, 0)),
                    pl.BlockSpec((k_pad, cout_pad), lambda o, i: (0, 0)),
                ],
                out_specs=(
                    pl.BlockSpec((tm, cout_pad), lambda o, i: (o * n_inner + i, 0)),
                    pl.BlockSpec((8, cout_pad), lambda o, i: (o, 0)),
                    pl.BlockSpec((8, cout_pad), lambda o, i: (o, 0)),
                ),
            ),
            compiler_params=cp1,
        )(patches_p, w_mat)

        # ---- kernel 2: BN apply on the bf16 intermediate, f32 final store -----
        y_bn = pl.pallas_call(
            functools.partial(_bn_apply_kernel, inv_m=inv_m, eps=eps),
            out_shape=jax.ShapeDtypeStruct((m_pad, cout_pad), jnp.float32),
            grid_spec=pltpu.PrefetchScalarGridSpec(
                num_scalar_prefetch=0,
                grid=(n_tiles_total,),
                in_specs=[
                    pl.BlockSpec((tm, cout_pad), lambda i: (i, 0)),
                    stats_spec_k2, stats_spec_k2, row_spec, row_spec,
                ],
                out_specs=pl.BlockSpec((tm, cout_pad), lambda i: (i, 0)),
            ),
            compiler_params=cp2,
        )(y, ch_sum, ch_sqsum, gamma_row, beta_row)

    # Un-pad (rows and channels), back to NCHW.
    # TODO(synk): fold this slice + NHWC->NCHW transpose into kernel 2 (per-tile
    # XLU transpose + an (N, Cout, OH*OW)-layout out BlockSpec) to drop this
    # extra XLA read+write HBM pass and the padded-channel write waste.
    out_nhwc = y_bn[:m_real, :cout].reshape(n, oh, ow, cout)
    return jnp.transpose(out_nhwc, (0, 3, 1, 2))


def init_conv_block_params(key, in_channels, out_channels, kernel_size=1):
    """Deterministic init mimicking PyTorch defaults."""
    kw_, kb = jax.random.split(key)
    fan_in = in_channels * kernel_size * kernel_size
    bound = 1.0 / jnp.sqrt(fan_in)
    w = jax.random.uniform(
        kw_, (out_channels, in_channels, kernel_size, kernel_size),
        minval=-bound, maxval=bound, dtype=jnp.float32)
    b = jax.random.uniform(kb, (out_channels,), minval=-bound, maxval=bound,
                           dtype=jnp.float32)
    gamma = jnp.ones((out_channels,), jnp.float32)   # BatchNorm2d default weight
    beta = jnp.zeros((out_channels,), jnp.float32)   # BatchNorm2d default bias
    return {"w": w, "b": b, "gamma": gamma, "beta": beta}


# ----------------------------------------------------------------------------
# References (pure JAX/XLA) for correctness checks
# ----------------------------------------------------------------------------
def _batchnorm_f32(y, gamma, beta, eps=1e-5):
    mean = jnp.mean(y, axis=(0, 2, 3), keepdims=True)
    var = jnp.mean((y - mean) ** 2, axis=(0, 2, 3), keepdims=True)
    y = (y - mean) / jnp.sqrt(var + eps)
    return y * gamma.reshape(1, -1, 1, 1) + beta.reshape(1, -1, 1, 1)


def _reference_f32(x_nchw, params, kernel_size, stride, padding, eps=1e-5):
    """Exact PyTorch semantics: f32 conv (with bias) + training-mode BN."""
    w, b = params["w"], params["b"]
    y = lax.conv_general_dilated(
        x_nchw, w, window_strides=(stride, stride),
        padding=[(padding, padding), (padding, padding)],
        dimension_numbers=("NCHW", "OIHW", "NCHW"))
    y = y + b.reshape(1, -1, 1, 1)
    return _batchnorm_f32(y, params["gamma"], params["beta"], eps)


def _reference_bf16_matmul(x_nchw, params, kernel_size, stride, padding, eps=1e-5):
    """Same semantics, but conv inputs rounded to bf16 (matches the kernel's
    MXU datapath) so the comparison against the Pallas kernels is tight."""
    w, b = params["w"], params["b"]
    y = lax.conv_general_dilated(
        x_nchw.astype(jnp.bfloat16), w.astype(jnp.bfloat16),
        window_strides=(stride, stride),
        padding=[(padding, padding), (padding, padding)],
        dimension_numbers=("NCHW", "OIHW", "NCHW"),
        preferred_element_type=jnp.float32)
    y = y + b.reshape(1, -1, 1, 1)
    return _batchnorm_f32(y, params["gamma"], params["beta"], eps)


if __name__ == "__main__":
    key = jax.random.PRNGKey(0)
    k1, k2, k3, k4 = jax.random.split(key, 4)

    # ---- Test 1: default conv_block (1x1, stride 1, pad 0) -> recompute path.
    N, CIN, H, W, COUT = 2, 4, 16, 16, 8
    x = jax.random.normal(k1, (N, CIN, H, W), dtype=jnp.float32)
    params = init_conv_block_params(k2, CIN, COUT, 1)

    fwd = jax.jit(functools.partial(conv_block_forward,
                                    kernel_size=1, stride=1, padding=0))
    out = jax.block_until_ready(fwd(x, params))

    ref_tight = _reference_bf16_matmul(x, params, 1, 1, 0)
    ref_exact = _reference_f32(x, params, 1, 1, 0)
    assert out.shape == ref_exact.shape == (N, COUT, H, W)
    assert jnp.allclose(out, ref_tight, atol=2e-3, rtol=2e-3), \
        "1x1: mismatch vs bf16-matched reference"
    assert jnp.allclose(out, ref_exact, atol=5e-2, rtol=5e-2), \
        "1x1: mismatch vs f32 reference"

    # ---- Test 2: same op, forced small row tile -> multi-step accumulation
    #      grid + per-core (parallel-axis) partial-stats slots.
    fwd_tiled = jax.jit(functools.partial(conv_block_forward, kernel_size=1,
                                          stride=1, padding=0, row_tile=64))
    out2 = jax.block_until_ready(fwd_tiled(x, params))
    assert jnp.allclose(out2, ref_tight, atol=2e-3, rtol=2e-3), \
        "1x1 tiled: mismatch vs bf16-matched reference"

    # ---- Test 3: 3x3 conv (K_pad > 2*Cout_pad) -> bf16-intermediate path.
    CIN3, COUT3, H3, W3 = 32, 8, 8, 8
    x3 = jax.random.normal(k3, (N, CIN3, H3, W3), dtype=jnp.float32)
    params3 = init_conv_block_params(k4, CIN3, COUT3, 3)
    fwd3 = jax.jit(functools.partial(conv_block_forward, kernel_size=3,
                                     stride=1, padding=1, row_tile=32))
    out3 = jax.block_until_ready(fwd3(x3, params3))

    ref3_tight = _reference_bf16_matmul(x3, params3, 3, 1, 1)
    ref3_exact = _reference_f32(x3, params3, 3, 1, 1)
    assert out3.shape == ref3_exact.shape == (N, COUT3, H3, W3)
    # Looser tight-check: this path stores the intermediate y in bf16.
    assert jnp.allclose(out3, ref3_tight, atol=2e-2, rtol=2e-2), \
        "3x3: mismatch vs bf16-matched reference"
    assert jnp.allclose(out3, ref3_exact, atol=5e-2, rtol=5e-2), \
        "3x3: mismatch vs f32 reference"

    print("KERNEL_OK")
</pallas_src>

<mosaic_0001>
module attributes {stable_mosaic.version = 11 : i64} {
  func.func @_stats_only_kernel(%arg0: i32, %arg1: i32, %arg2: memref<512x16xbf16, #tpu.memory_space<vmem>>, %arg3: memref<16x128xbf16, #tpu.memory_space<vmem>>, %arg4: memref<8x128xf32, #tpu.memory_space<vmem>>, %arg5: memref<8x128xf32, #tpu.memory_space<vmem>>) attributes {dimension_semantics = [#tpu.dimension_semantics<parallel>, #tpu.dimension_semantics<arbitrary>], iteration_bounds = array<i64: 1, 1>, scalar_prefetch = 0 : i64, scratch_operands = 0 : i64, tpu.core_type = #tpu.core_type<tc>, window_params = [{transform_indices = @transform_0, window_bounds = array<i64: 512, 16>}, {pipeline_mode = #tpu.pipeline_mode<synchronous>, transform_indices = @transform_1, window_bounds = array<i64: 16, 128>}, {transform_indices = @transform_2, window_bounds = array<i64: 8, 128>}, {transform_indices = @transform_3, window_bounds = array<i64: 8, 128>}]} {
    %c0_i32 = arith.constant 0 : i32
    %0 = arith.cmpi eq, %arg1, %c0_i32 : i32
    %1 = arith.extui %0 : i1 to i32
    %c0_i32_0 = arith.constant 0 : i32
    %2 = arith.cmpi ne, %1, %c0_i32_0 : i32
    scf.if %2 {
      %cst_14 = arith.constant 0.000000e+00 : f32
      %17 = vector.broadcast %cst_14 : f32 to vector<8x128xf32>
      %c0_15 = arith.constant 0 : index
      %c0_16 = arith.constant 0 : index
      %18 = vector.load %arg4[%c0_15, %c0_16] : memref<8x128xf32, #tpu.memory_space<vmem>>, vector<8x128xf32>
      tpu.vector_store %arg4[%c0_15, %c0_16], %17 {strides = array<i32>} : memref<8x128xf32, #tpu.memory_space<vmem>>, vector<8x128xf32>,
      %cst_17 = arith.constant 0.000000e+00 : f32
      %19 = vector.broadcast %cst_17 : f32 to vector<8x128xf32>
      %c0_18 = arith.constant 0 : index
      %c0_19 = arith.constant 0 : index
      %20 = vector.load %arg5[%c0_18, %c0_19] : memref<8x128xf32, #tpu.memory_space<vmem>>, vector<8x128xf32>
      tpu.vector_store %arg5[%c0_18, %c0_19], %19 {strides = array<i32>} : memref<8x128xf32, #tpu.memory_space<vmem>>, vector<8x128xf32>,
    } else {
    }
    %c0 = arith.constant 0 : index
    %c0_1 = arith.constant 0 : index
    %3 = vector.load %arg2[%c0, %c0_1] : memref<512x16xbf16, #tpu.memory_space<vmem>>, vector<512x16xbf16>
    %c0_2 = arith.constant 0 : index
    %c0_3 = arith.constant 0 : index
    %4 = vector.load %arg3[%c0_2, %c0_3] : memref<16x128xbf16, #tpu.memory_space<vmem>>, vector<16x128xbf16>
    %cst = arith.constant dense<0.000000e+00> : vector<512x128xf32>
    %5 = tpu.matmul %3, %4, %cst {dimension_numbers = #tpu.dot_dimension_numbers<[1], [0], [0], [1], [0, 0, 1, 1], [], []>} : vector<512x16xbf16>, vector<16x128xbf16>, vector<512x128xf32> -> vector<512x128xf32>
    %c0_4 = arith.constant 0 : index
    %c0_5 = arith.constant 0 : index
    %6 = vector.load %arg4[%c0_4, %c0_5] : memref<8x128xf32, #tpu.memory_space<vmem>>, vector<1x128xf32>
    %cst_6 = arith.constant dense<0.000000e+00> : vector<128xf32>
    %7 = vector.multi_reduction <add>, %5, %cst_6 [0] : vector<512x128xf32> to vector<128xf32>
    %8 = vector.shape_cast %7 : vector<128xf32> to vector<1x128xf32>
    %9 = arith.addf %6, %8 : vector<1x128xf32>
    %c0_7 = arith.constant 0 : index
    %c0_8 = arith.constant 0 : index
    %10 = vector.load %arg4[%c0_7, %c0_8] : memref<8x128xf32, #tpu.memory_space<vmem>>, vector<1x128xf32>
    tpu.vector_store %arg4[%c0_7, %c0_8], %9 {strides = array<i32>} : memref<8x128xf32, #tpu.memory_space<vmem>>, vector<1x128xf32>,
    %c0_9 = arith.constant 0 : index
    %c0_10 = arith.constant 0 : index
    %11 = vector.load %arg5[%c0_9, %c0_10] : memref<8x128xf32, #tpu.memory_space<vmem>>, vector<1x128xf32>
    %12 = arith.mulf %5, %5 : vector<512x128xf32>
    %cst_11 = arith.constant dense<0.000000e+00> : vector<128xf32>
    %13 = vector.multi_reduction <add>, %12, %cst_11 [0] : vector<512x128xf32> to vector<128xf32>
    %14 = vector.shape_cast %13 : vector<128xf32> to vector<1x128xf32>
    %15 = arith.addf %11, %14 : vector<1x128xf32>
    %c0_12 = arith.constant 0 : index
    %c0_13 = arith.constant 0 : index
    %16 = vector.load %arg5[%c0_12, %c0_13] : memref<8x128xf32, #tpu.memory_space<vmem>>, vector<1x128xf32>
    tpu.vector_store %arg5[%c0_12, %c0_13], %15 {strides = array<i32>} : memref<8x128xf32, #tpu.memory_space<vmem>>, vector<1x128xf32>,
    return
  }
  func.func @transform_0(%arg0: i32, %arg1: i32) -> (i32, i32) {
    %c1_i32 = arith.constant 1 : i32
    %0 = arith.muli %arg0, %c1_i32 : i32
    %1 = arith.addi %0, %arg1 : i32
    %c0_i32 = arith.constant 0 : i32
    %c0_i32_0 = arith.constant 0 : i32
    return %1, %c0_i32 : i32, i32
  }
  func.func @transform_1(%arg0: i32, %arg1: i32) -> (i32, i32) {
    %c0_i32 = arith.constant 0 : i32
    %c0_i32_0 = arith.constant 0 : i32
    %c0_i32_1 = arith.constant 0 : i32
    return %c0_i32, %c0_i32_0 : i32, i32
  }
  func.func @transform_2(%arg0: i32, %arg1: i32) -> (i32, i32) {
    %c0_i32 = arith.constant 0 : i32
    %c0_i32_0 = arith.constant 0 : i32
    return %arg0, %c0_i32 : i32, i32
  }
  func.func @transform_3(%arg0: i32, %arg1: i32) -> (i32, i32) {
    %c0_i32 = arith.constant 0 : i32
    %c0_i32_0 = arith.constant 0 : i32
    return %arg0, %c0_i32 : i32, i32
  }
}

module attributes {stable_mosaic.version = 11 : i64} {
  func.func @_matmul_bn_kernel(%arg0: i32, %arg1: memref<512x16xbf16, #tpu.memory_space<vmem>>, %arg2: memref<16x128xbf16, #tpu.memory_space<vmem>>, %arg3: memref<8x128xf32, #tpu.memory_space<vmem>>, %arg4: memref<8x128xf32, #tpu.memory_space<vmem>>, %arg5: memref<1x128xf32, #tpu.memory_space<vmem>>, %arg6: memref<1x128xf32, #tpu.memory_space<vmem>>, %arg7: memref<512x128xf32, #tpu.memory_space<vmem>>) attributes {dimension_semantics = [#tpu.dimension_semantics<parallel>], iteration_bounds = array<i64: 1>, scalar_prefetch = 0 : i64, scratch_operands = 0 : i64, tpu.core_type = #tpu.core_type<tc>, window_params = [{transform_indices = @transform_0, window_bounds = array<i64: 512, 16>}, {pipeline_mode = #tpu.pipeline_mode<synchronous>, transform_indices = @transform_1, window_bounds = array<i64: 16, 128>}, {pipeline_mode = #tpu.pipeline_mode<synchronous>, transform_indices = @transform_2, window_bounds = array<i64: 8, 128>}, {pipeline_mode = #tpu.pipeline_mode<synchronous>, transform_indices = @transform_3, window_bounds = array<i64: 8, 128>}, {pipeline_mode = #tpu.pipeline_mode<synchronous>, transform_indices = @transform_4, window_bounds = array<i64: 1, 128>}, {pipeline_mode = #tpu.pipeline_mode<synchronous>, transform_indices = @transform_5, window_bounds = array<i64: 1, 128>}, {transform_indices = @transform_6, window_bounds = array<i64: 512, 128>}]} {
    %c0 = arith.constant 0 : index
    %c0_0 = arith.constant 0 : index
    %0 = vector.load %arg3[%c0, %c0_0] : memref<8x128xf32, #tpu.memory_space<vmem>>, vector<8x128xf32>
    %cst = arith.constant dense<0.000000e+00> : vector<128xf32>
    %1 = vector.multi_reduction <add>, %0, %cst [0] : vector<8x128xf32> to vector<128xf32>
    %2 = vector.shape_cast %1 : vector<128xf32> to vector<1x128xf32>
    %c0_1 = arith.constant 0 : index
    %c0_2 = arith.constant 0 : index
    %3 = vector.load %arg4[%c0_1, %c0_2] : memref<8x128xf32, #tpu.memory_space<vmem>>, vector<8x128xf32>
    %cst_3 = arith.constant dense<0.000000e+00> : vector<128xf32>
    %4 = vector.multi_reduction <add>, %3, %cst_3 [0] : vector<8x128xf32> to vector<128xf32>
    %5 = vector.shape_cast %4 : vector<128xf32> to vector<1x128xf32>
    %cst_4 = arith.constant 0.001953125 : f32
    %6 = vector.broadcast %cst_4 : f32 to vector<1x128xf32>
    %7 = arith.mulf %2, %6 : vector<1x128xf32>
    %cst_5 = arith.constant 0.001953125 : f32
    %8 = vector.broadcast %cst_5 : f32 to vector<1x128xf32>
    %9 = arith.mulf %5, %8 : vector<1x128xf32>
    %10 = arith.mulf %7, %7 : vector<1x128xf32>
    %11 = arith.subf %9, %10 : vector<1x128xf32>
    %cst_6 = arith.constant 0.000000e+00 : f32
    %12 = vector.broadcast %cst_6 : f32 to vector<1x128xf32>
    %13 = arith.maximumf %11, %12 : vector<1x128xf32>
    %cst_7 = arith.constant 9.99999974E-6 : f32
    %14 = vector.broadcast %cst_7 : f32 to vector<1x128xf32>
    %15 = arith.addf %13, %14 : vector<1x128xf32>
    %16 = math.rsqrt %15 : vector<1x128xf32>
    %c0_8 = arith.constant 0 : index
    %c0_9 = arith.constant 0 : index
    %17 = vector.load %arg5[%c0_8, %c0_9] : memref<1x128xf32, #tpu.memory_space<vmem>>, vector<1x128xf32>
    %18 = arith.mulf %17, %16 : vector<1x128xf32>
    %c0_10 = arith.constant 0 : index
    %c0_11 = arith.constant 0 : index
    %19 = vector.load %arg6[%c0_10, %c0_11] : memref<1x128xf32, #tpu.memory_space<vmem>>, vector<1x128xf32>
    %20 = arith.mulf %7, %18 : vector<1x128xf32>
    %21 = arith.subf %19, %20 : vector<1x128xf32>
    %c0_12 = arith.constant 0 : index
    %c0_13 = arith.constant 0 : index
    %22 = vector.load %arg1[%c0_12, %c0_13] : memref<512x16xbf16, #tpu.memory_space<vmem>>, vector<512x16xbf16>
    %c0_14 = arith.constant 0 : index
    %c0_15 = arith.constant 0 : index
    %23 = vector.load %arg2[%c0_14, %c0_15] : memref<16x128xbf16, #tpu.memory_space<vmem>>, vector<16x128xbf16>
    %cst_16 = arith.constant dense<0.000000e+00> : vector<512x128xf32>
    %24 = tpu.matmul %22, %23, %cst_16 {dimension_numbers = #tpu.dot_dimension_numbers<[1], [0], [0], [1], [0, 0, 1, 1], [], []>} : vector<512x16xbf16>, vector<16x128xbf16>, vector<512x128xf32> -> vector<512x128xf32>
    %25 = vector.broadcast %18 : vector<1x128xf32> to vector<512x128xf32>
    %26 = arith.mulf %24, %25 : vector<512x128xf32>
    %27 = vector.broadcast %21 : vector<1x128xf32> to vector<512x128xf32>
    %28 = arith.addf %26, %27 : vector<512x128xf32>
    %c0_17 = arith.constant 0 : index
    %c0_18 = arith.constant 0 : index
    %29 = vector.load %arg7[%c0_17, %c0_18] : memref<512x128xf32, #tpu.memory_space<vmem>>, vector<512x128xf32>
    tpu.vector_store %arg7[%c0_17, %c0_18], %28 {strides = array<i32>} : memref<512x128xf32, #tpu.memory_space<vmem>>, vector<512x128xf32>,
    return
  }
  func.func @transform_0(%arg0: i32) -> (i32, i32) {
    %c0_i32 = arith.constant 0 : i32
    %c0_i32_0 = arith.constant 0 : i32
    return %arg0, %c0_i32 : i32, i32
  }
  func.func @transform_1(%arg0: i32) -> (i32, i32) {
    %c0_i32 = arith.constant 0 : i32
    %c0_i32_0 = arith.constant 0 : i32
    %c0_i32_1 = arith.constant 0 : i32
    return %c0_i32, %c0_i32_0 : i32, i32
  }
  func.func @transform_2(%arg0: i32) -> (i32, i32) {
    %c0_i32 = arith.constant 0 : i32
    %c0_i32_0 = arith.constant 0 : i32
    %c0_i32_1 = arith.constant 0 : i32
    return %c0_i32, %c0_i32_0 : i32, i32
  }
  func.func @transform_3(%arg0: i32) -> (i32, i32) {
    %c0_i32 = arith.constant 0 : i32
    %c0_i32_0 = arith.constant 0 : i32
    %c0_i32_1 = arith.constant 0 : i32
    return %c0_i32, %c0_i32_0 : i32, i32
  }
  func.func @transform_4(%arg0: i32) -> (i32, i32) {
    %c0_i32 = arith.constant 0 : i32
    %c0_i32_0 = arith.constant 0 : i32
    %c0_i32_1 = arith.constant 0 : i32
    return %c0_i32, %c0_i32_0 : i32, i32
  }
  func.func @transform_5(%arg0: i32) -> (i32, i32) {
    %c0_i32 = arith.constant 0 : i32
    %c0_i32_0 = arith.constant 0 : i32
    %c0_i32_1 = arith.constant 0 : i32
    return %c0_i32, %c0_i32_0 : i32, i32
  }
  func.func @transform_6(%arg0: i32) -> (i32, i32) {
    %c0_i32 = arith.constant 0 : i32
    %c0_i32_0 = arith.constant 0 : i32
    return %arg0, %c0_i32 : i32, i32
  }
}

</mosaic_0001>

<llo_original>
// kernel: conv_block_forward.2
$region0: #{conv_block_forward.2}
  #allocation0 [shape = 'u32[]', space=smem, size = 0x4, offset = 0x4, fixed_abs, tag = 'smem constant byte address 0x4 - core index']
  #allocation1 [shape = 'u32[144,128]{1,0:T(1,128)}', space=vmem, size = 0x12000, scoped, tag = 'internal scratch']
  %s0 = inlined_call_operand.vmem [shape: bf16[512,16], index: 0, kind: input, shape index: {}]
  %s1 = inlined_call_operand.vmem [shape: bf16[16,128], index: 1, kind: input, shape index: {}]
  %s2 = inlined_call_operand.vmem [shape: f32[8,128], index: 2, kind: output, shape index: {0}]
  %s3 = inlined_call_operand.vmem [shape: f32[8,128], index: 3, kind: output, shape index: {1}]
  %4 = xla_tuple %s2, %s3
  %s5 = sld [smem:[#allocation0]]
  $region30: #{conv_block_forward.2} parent=0
    _
  %s7 = ssub.s32 1, %s5
  %s8 = scalar_select 0, %s7, %s5
  // Predicated region
  $region2: #{conv_block_forward.2} parent=0 // pred_check
    _
  $region3: #{conv_block_forward.2} parent=0 // pred_check_branch
    %10 = sbr.rel (0) target = $region5
  $region4: #{conv_block_forward.2} parent=0 // pred_region
    %s11 = sadd.s32 0, 0
    %s12 = smul.u32 64, %s11
    %p13 = scmp.lt.s32.totalorder %s12, 63
    %s14 = scalar_select %p13, %s12, 63
    %s15 = smul.addr %s14, 4
    %s16 = scalar_lea.vmem %s0, %s15
    %s17 = sadd.s32 0, 0
    %s18 = smul.u32 64, %s17
  $region5: #{conv_block_forward.2} parent=0 // pred_fallthru
    _
  // Predicated region
  $region6: #{conv_block_forward.2} parent=0 // pred_check
    _
  $region7: #{conv_block_forward.2} parent=0 // pred_check_branch
    %20 = sbr.rel (0) target = $region9
  $region8: #{conv_block_forward.2} parent=0 // pred_region
    _
  $region9: #{conv_block_forward.2} parent=0 // pred_fallthru
    _
  %s21 = sadd.s32 0, 0
  %s22 = smul.u32 64, %s21
  %p23 = scmp.lt.s32.totalorder %s22, 63
  %s24 = scalar_select %p23, %s22, 63
  %s25 = smul.addr %s24, 4
  %s26 = scalar_lea.vmem %s0, %s25
  %s27 = sadd.s32 0, 0
  %s28 = smul.u32 64, %s27
  %p29 = scmp.lt.s32.totalorder %s28, 63
  %s30 = scalar_select %p29, %s28, 63
  %s31 = smul.addr %s30, 4
  %s32 = scalar_lea.vmem %s0, %s31
  %s33 = sadd.s32 0, 0
  %s34 = smul.u32 64, %s33
  %p36 = scmp.eq.s32.totalorder 0, 0
  // Predicated region
  $region10: #{conv_block_forward.2} parent=0 // pred_check
    %p37 = pneg %p36
  $region11: #{conv_block_forward.2} parent=0 // pred_check_branch
    %39 = sbr.rel (%p37) target = $region13
  $region12: #{conv_block_forward.2} parent=0 // pred_region
    %40 = vst [vmem:[%s2] sm:$0xff] 0.0
    %41 = vst [vmem:[%s3] sm:$0xff] 0.0
  $region13: #{conv_block_forward.2} parent=0 // pred_fallthru
    _
  %v42 = vld [vmem:[%s32] sm:$0xf]
  %v43 = vld [vmem:[%s32 + $0x4] sm:$0xf]
  %v44 = vld [vmem:[%s32 + $0x8] sm:$0xf]
  %v45 = vld [vmem:[%s32 + $0xc] sm:$0xf]
  %v46 = vld [vmem:[%s32 + $0x10] sm:$0xf]
  %v47 = vld [vmem:[%s32 + $0x14] sm:$0xf]
  %v48 = vld [vmem:[%s32 + $0x18] sm:$0xf]
  %v49 = vld [vmem:[%s32 + $0x1c] sm:$0xf]
  %v50 = vld [vmem:[%s32 + $0x20] sm:$0xf]
  %v51 = vld [vmem:[%s32 + $0x24] sm:$0xf]
  %v52 = vld [vmem:[%s32 + $0x28] sm:$0xf]
  %v53 = vld [vmem:[%s32 + $0x2c] sm:$0xf]
  %v54 = vld [vmem:[%s32 + $0x30] sm:$0xf]
  %v55 = vld [vmem:[%s32 + $0x34] sm:$0xf]
  %v56 = vld [vmem:[%s32 + $0x38] sm:$0xf]
  %v57 = vld [vmem:[%s32 + $0x3c] sm:$0xf]
  %v58 = vld [vmem:[%s32 + $0x40] sm:$0xf]
  %v59 = vld [vmem:[%s32 + $0x44] sm:$0xf]
  %v60 = vld [vmem:[%s32 + $0x48] sm:$0xf]
  %v61 = vld [vmem:[%s32 + $0x4c] sm:$0xf]
  %v62 = vld [vmem:[%s32 + $0x50] sm:$0xf]
  %v63 = vld [vmem:[%s32 + $0x54] sm:$0xf]
  %v64 = vld [vmem:[%s32 + $0x58] sm:$0xf]
  %v65 = vld [vmem:[%s32 + $0x5c] sm:$0xf]
  %v66 = vld [vmem:[%s32 + $0x60] sm:$0xf]
  %v67 = vld [vmem:[%s32 + $0x64] sm:$0xf]
  %v68 = vld [vmem:[%s32 + $0x68] sm:$0xf]
  %v69 = vld [vmem:[%s32 + $0x6c] sm:$0xf]
  %v70 = vld [vmem:[%s32 + $0x70] sm:$0xf]
  %v71 = vld [vmem:[%s32 + $0x74] sm:$0xf]
  %v72 = vld [vmem:[%s32 + $0x78] sm:$0xf]
  %v73 = vld [vmem:[%s32 + $0x7c] sm:$0xf]
  %v74 = vld [vmem:[%s32 + $0x80] sm:$0xf]
  %v75 = vld [vmem:[%s32 + $0x84] sm:$0xf]
  %v76 = vld [vmem:[%s32 + $0x88] sm:$0xf]
  %v77 = vld [vmem:[%s32 + $0x8c] sm:$0xf]
  %v78 = vld [vmem:[%s32 + $0x90] sm:$0xf]
  %v79 = vld [vmem:[%s32 + $0x94] sm:$0xf]
  %v80 = vld [vmem:[%s32 + $0x98] sm:$0xf]
  %v81 = vld [vmem:[%s32 + $0x9c] sm:$0xf]
  %v82 = vld [vmem:[%s32 + $0xa0] sm:$0xf]
  %v83 = vld [vmem:[%s32 + $0xa4] sm:$0xf]
  %v84 = vld [vmem:[%s32 + $0xa8] sm:$0xf]
  %v85 = vld [vmem:[%s32 + $0xac] sm:$0xf]
  %v86 = vld [vmem:[%s32 + $0xb0] sm:$0xf]
  %v87 = vld [vmem:[%s32 + $0xb4] sm:$0xf]
  %v88 = vld [vmem:[%s32 + $0xb8] sm:$0xf]
  %v89 = vld [vmem:[%s32 + $0xbc] sm:$0xf]
  %v90 = vld [vmem:[%s32 + $0xc0] sm:$0xf]
  %v91 = vld [vmem:[%s32 + $0xc4] sm:$0xf]
  %v92 = vld [vmem:[%s32 + $0xc8] sm:$0xf]
  %v93 = vld [vmem:[%s32 + $0xcc] sm:$0xf]
  %v94 = vld [vmem:[%s32 + $0xd0] sm:$0xf]
  %v95 = vld [vmem:[%s32 + $0xd4] sm:$0xf]
  %v96 = vld [vmem:[%s32 + $0xd8] sm:$0xf]
  %v97 = vld [vmem:[%s32 + $0xdc] sm:$0xf]
  %v98 = vld [vmem:[%s32 + $0xe0] sm:$0xf]
  %v99 = vld [vmem:[%s32 + $0xe4] sm:$0xf]
  %v100 = vld [vmem:[%s32 + $0xe8] sm:$0xf]
  %v101 = vld [vmem:[%s32 + $0xec] sm:$0xf]
  %v102 = vld [vmem:[%s32 + $0xf0] sm:$0xf]
  %v103 = vld [vmem:[%s32 + $0xf4] sm:$0xf]
  %v104 = vld [vmem:[%s32 + $0xf8] sm:$0xf]
  %v105 = vld [vmem:[%s32 + $0xfc] sm:$0xf]
  %v106 = vld [vmem:[%s1] sm:$0xf]
  %v107 = vld [vmem:[%s1 + $0x4] sm:$0xf]
  %v172 = vunpack.c.l.b16 %v42
  %v173 = vunpack.c.l.b16 %v43
  %v174 = vunpack.c.l.b16 %v44
  %v175 = vunpack.c.l.b16 %v45
  %v176 = vunpack.c.l.b16 %v46
  %v177 = vunpack.c.l.b16 %v47
  %v178 = vunpack.c.l.b16 %v48
  %v179 = vunpack.c.l.b16 %v49
  %v180 = vunpack.c.l.b16 %v50
  %v181 = vunpack.c.l.b16 %v51
  %v182 = vunpack.c.l.b16 %v52
  %v183 = vunpack.c.l.b16 %v53
  %v184 = vunpack.c.l.b16 %v54
  %v185 = vunpack.c.l.b16 %v55
  %v186 = vunpack.c.l.b16 %v56
  %v187 = vunpack.c.l.b16 %v57
  %v188 = vunpack.c.l.b16 %v58
  %v189 = vunpack.c.l.b16 %v59
  %v190 = vunpack.c.l.b16 %v60
  %v191 = vunpack.c.l.b16 %v61
  %v192 = vunpack.c.l.b16 %v62
  %v193 = vunpack.c.l.b16 %v63
  %v194 = vunpack.c.l.b16 %v64
  %v195 = vunpack.c.l.b16 %v65
  %v196 = vunpack.c.l.b16 %v66
  %v197 = vunpack.c.l.b16 %v67
  %v198 = vunpack.c.l.b16 %v68
  %v199 = vunpack.c.l.b16 %v69
  %v200 = vunpack.c.l.b16 %v70
  %v201 = vunpack.c.l.b16 %v71
  %v202 = vunpack.c.l.b16 %v72
  %v203 = vunpack.c.l.b16 %v73
  %v204 = vunpack.c.l.b16 %v74
  %v205 = vunpack.c.l.b16 %v75
  %v206 = vunpack.c.l.b16 %v76
  %v207 = vunpack.c.l.b16 %v77
  %v208 = vunpack.c.l.b16 %v78
  %v209 = vunpack.c.l.b16 %v79
  %v210 = vunpack.c.l.b16 %v80
  %v211 = vunpack.c.l.b16 %v81
  %v212 = vunpack.c.l.b16 %v82
  %v213 = vunpack.c.l.b16 %v83
  %v214 = vunpack.c.l.b16 %v84
  %v215 = vunpack.c.l.b16 %v85
  %v216 = vunpack.c.l.b16 %v86
  %v217 = vunpack.c.l.b16 %v87
  %v218 = vunpack.c.l.b16 %v88
  %v219 = vunpack.c.l.b16 %v89
  %v220 = vunpack.c.l.b16 %v90
  %v221 = vunpack.c.l.b16 %v91
  %v222 = vunpack.c.l.b16 %v92
  %v223 = vunpack.c.l.b16 %v93
  %v224 = vunpack.c.l.b16 %v94
  %v225 = vunpack.c.l.b16 %v95
  %v226 = vunpack.c.l.b16 %v96
  %v227 = vunpack.c.l.b16 %v97
  %v228 = vunpack.c.l.b16 %v98
  %v229 = vunpack.c.l.b16 %v99
  %v230 = vunpack.c.l.b16 %v100
  %v231 = vunpack.c.l.b16 %v101
  %v232 = vunpack.c.l.b16 %v102
  %v233 = vunpack.c.l.b16 %v103
  %v234 = vunpack.c.l.b16 %v104
  %v235 = vunpack.c.l.b16 %v105
  %v236 = vpack.c.b16 %v173, %v172
  %v237 = vpack.c.b16 %v175, %v174
  %v238 = vpack.c.b16 %v177, %v176
  %v239 = vpack.c.b16 %v179, %v178
  %v240 = vpack.c.b16 %v181, %v180
  %v241 = vpack.c.b16 %v183, %v182
  %v242 = vpack.c.b16 %v185, %v184
  %v243 = vpack.c.b16 %v187, %v186
  %v244 = vpack.c.b16 %v189, %v188
  %v245 = vpack.c.b16 %v191, %v190
  %v246 = vpack.c.b16 %v193, %v192
  %v247 = vpack.c.b16 %v195, %v194
  %v248 = vpack.c.b16 %v197, %v196
  %v249 = vpack.c.b16 %v199, %v198
  %v250 = vpack.c.b16 %v201, %v200
  %v251 = vpack.c.b16 %v203, %v202
  %v252 = vpack.c.b16 %v205, %v204
  %v253 = vpack.c.b16 %v207, %v206
  %v254 = vpack.c.b16 %v209, %v208
  %v255 = vpack.c.b16 %v211, %v210
  %v256 = vpack.c.b16 %v213, %v212
  %v257 = vpack.c.b16 %v215, %v214
  %v258 = vpack.c.b16 %v217, %v216
  %v259 = vpack.c.b16 %v219, %v218
  %v260 = vpack.c.b16 %v221, %v220
  %v261 = vpack.c.b16 %v223, %v222
  %v262 = vpack.c.b16 %v225, %v224
  %v263 = vpack.c.b16 %v227, %v226
  %v264 = vpack.c.b16 %v229, %v228
  %v265 = vpack.c.b16 %v231, %v230
  %v266 = vpack.c.b16 %v233, %v232
  %v267 = vpack.c.b16 %v235, %v234
  %v270 = vunpack.c.l.b16 %v106
  %v271 = vunpack.c.l.b16 %v107
  %v272 = vpack.c.b16 %v271, %v270
  %vm274 = vcmask 130048
  %v276 = vsel %vm274, %v236, 0
  %v279 = vsel %vm274, %v237, 0
  %v282 = vsel %vm274, %v238, 0
  %v285 = vsel %vm274, %v239, 0
  %v288 = vsel %vm274, %v240, 0
  %v291 = vsel %vm274, %v241, 0
  %v294 = vsel %vm274, %v242, 0
  %v297 = vsel %vm274, %v243, 0
  %v300 = vsel %vm274, %v244, 0
  %v303 = vsel %vm274, %v245, 0
  %v306 = vsel %vm274, %v246, 0
  %v309 = vsel %vm274, %v247, 0
  %v312 = vsel %vm274, %v248, 0
  %v315 = vsel %vm274, %v249, 0
  %v318 = vsel %vm274, %v250, 0
  %v321 = vsel %vm274, %v251, 0
  %v324 = vsel %vm274, %v252, 0
  %v327 = vsel %vm274, %v253, 0
  %v330 = vsel %vm274, %v254, 0
  %v333 = vsel %vm274, %v255, 0
  %v336 = vsel %vm274, %v256, 0
  %v339 = vsel %vm274, %v257, 0
  %v342 = vsel %vm274, %v258, 0
  %v345 = vsel %vm274, %v259, 0
  %v348 = vsel %vm274, %v260, 0
  %v351 = vsel %vm274, %v261, 0
  %v354 = vsel %vm274, %v262, 0
  %v357 = vsel %vm274, %v263, 0
  %v360 = vsel %vm274, %v264, 0
  %v363 = vsel %vm274, %v265, 0
  %v366 = vsel %vm274, %v266, 0
  %v369 = vsel %vm274, %v267, 0
  %371 = vmatprep.subr.bf16.mxu0 0
  %372 = vmatpush1.bf16.msra.mxu0 %v272
  %373 = vmatprep.subr.bf16.mxu0 0
  %374 = vmatpush1.bf16.msra.mxu0 0
  %375 = vmatprep.subr.bf16.mxu0 0
  %376 = vmatpush1.bf16.msra.mxu0 0
  %377 = vmatprep.subr.bf16.mxu0 0
  %378 = vmatpush1.bf16.msra.mxu0 0
  %379 = vmatprep.subr.bf16.mxu0 0
  %380 = vmatpush1.bf16.msra.mxu0 0
  %381 = vmatprep.subr.bf16.mxu0 0
  %382 = vmatpush1.bf16.msra.mxu0 0
  %383 = vmatprep.subr.bf16.mxu0 0
  %384 = vmatpush1.bf16.msra.mxu0 0
  %385 = vmatprep.subr.bf16.mxu0 0
  %386 = vmatpush1.bf16.msra.mxu0 0
  %387 = vmatprep.subr.bf16.mxu0 0
  %388 = vmatpush1.bf16.msra.mxu0 0
  %389 = vmatprep.subr.bf16.mxu0 0
  %390 = vmatpush1.bf16.msra.mxu0 0
  %391 = vmatprep.subr.bf16.mxu0 0
  %392 = vmatpush1.bf16.msra.mxu0 0
  %393 = vmatprep.subr.bf16.mxu0 0
  %394 = vmatpush1.bf16.msra.mxu0 0
  %395 = vmatprep.subr.bf16.mxu0 0
  %396 = vmatpush1.bf16.msra.mxu0 0
  %397 = vmatprep.subr.bf16.mxu0 0
  %398 = vmatpush1.bf16.msra.mxu0 0
  %399 = vmatprep.subr.bf16.mxu0 0
  %400 = vmatpush1.bf16.msra.mxu0 0
  %401 = vmatprep.subr.bf16.mxu0 0
  %402 = vmatpush1.bf16.msra.mxu0 0
  %403 = vmatprep.mubr.bf16.mxu0 0
  %404 = vmatmul.mubr.bf16.gmra.mrb[0].mxu0 %v276
  %v405 = vpop.f32.mrb[0].mxu0
  %v406 = vadd.f32 0.0, %v405
  %v407 = vpop.f32.mrb[0].mxu0
  %v408 = vpop.f32.mrb[0].mxu0
  %v409 = vadd.f32 0.0, %v408
  %v410 = vpop.f32.mrb[0].mxu0
  %411 = vmatprep.mubr.bf16.mxu0 0
  %412 = vmatmul.mubr.bf16.gmra.mrb[0].mxu0 %v279
  %v413 = vpop.f32.mrb[0].mxu0
  %v414 = vadd.f32 0.0, %v413
  %v415 = vpop.f32.mrb[0].mxu0
  %v416 = vpop.f32.mrb[0].mxu0
  %v417 = vadd.f32 0.0, %v416
  %v418 = vpop.f32.mrb[0].mxu0
  %419 = vmatprep.mubr.bf16.mxu0 0
  %420 = vmatmul.mubr.bf16.gmra.mrb[0].mxu0 %v282
  %v421 = vpop.f32.mrb[0].mxu0
  %v422 = vadd.f32 0.0, %v421
  %v423 = vpop.f32.mrb[0].mxu0
  %v424 = vpop.f32.mrb[0].mxu0
  %v425 = vadd.f32 0.0, %v424
  %v426 = vpop.f32.mrb[0].mxu0
  %427 = vmatprep.mubr.bf16.mxu0 0
  %428 = vmatmul.mubr.bf16.gmra.mrb[0].mxu0 %v285
  %v429 = vpop.f32.mrb[0].mxu0
  %v430 = vadd.f32 0.0, %v429
  %v431 = vpop.f32.mrb[0].mxu0
  %v432 = vpop.f32.mrb[0].mxu0
  %v433 = vadd.f32 0.0, %v432
  %v434 = vpop.f32.mrb[0].mxu0
  %435 = vmatprep.mubr.bf16.mxu0 0
  %436 = vmatmul.mubr.bf16.gmra.mrb[0].mxu0 %v288
  %v437 = vpop.f32.mrb[0].mxu0
  %v438 = vadd.f32 0.0, %v437
  %v439 = vpop.f32.mrb[0].mxu0
  %v440 = vpop.f32.mrb[0].mxu0
  %v441 = vadd.f32 0.0, %v440
  %v442 = vpop.f32.mrb[0].mxu0
  %443 = vmatprep.mubr.bf16.mxu0 0
  %444 = vmatmul.mubr.bf16.gmra.mrb[0].mxu0 %v291
  %v445 = vpop.f32.mrb[0].mxu0
  %v446 = vadd.f32 0.0, %v445
  %v447 = vpop.f32.mrb[0].mxu0
  %v448 = vpop.f32.mrb[0].mxu0
  %v449 = vadd.f32 0.0, %v448
  %v450 = vpop.f32.mrb[0].mxu0
  %451 = vmatprep.mubr.bf16.mxu0 0
  %452 = vmatmul.mubr.bf16.gmra.mrb[0].mxu0 %v294
  %v453 = vpop.f32.mrb[0].mxu0
  %v454 = vadd.f32 0.0, %v453
  %v455 = vpop.f32.mrb[0].mxu0
  %v456 = vpop.f32.mrb[0].mxu0
  %v457 = vadd.f32 0.0, %v456
  %v458 = vpop.f32.mrb[0].mxu0
  %459 = vmatprep.mubr.bf16.mxu0 0
  %460 = vmatmul.mubr.bf16.gmra.mrb[0].mxu0 %v297
  %v461 = vpop.f32.mrb[0].mxu0
  %v462 = vadd.f32 0.0, %v461
  %v463 = vpop.f32.mrb[0].mxu0
  %v464 = vpop.f32.mrb[0].mxu0
  %v465 = vadd.f32 0.0, %v464
  %v466 = vpop.f32.mrb[0].mxu0
  %467 = vmatprep.mubr.bf16.mxu0 0
  %468 = vmatmul.mubr.bf16.gmra.mrb[0].mxu0 %v300
  %v469 = vpop.f32.mrb[0].mxu0
  %v470 = vadd.f32 0.0, %v469
  %v471 = vpop.f32.mrb[0].mxu0
  %v472 = vpop.f32.mrb[0].mxu0
  %v473 = vadd.f32 0.0, %v472
  %v474 = vpop.f32.mrb[0].mxu0
  %475 = vmatprep.mubr.bf16.mxu0 0
  %476 = vmatmul.mubr.bf16.gmra.mrb[0].mxu0 %v303
  %v477 = vpop.f32.mrb[0].mxu0
  %v478 = vadd.f32 0.0, %v477
  %v479 = vpop.f32.mrb[0].mxu0
  %v480 = vpop.f32.mrb[0].mxu0
  %v481 = vadd.f32 0.0, %v480
  %v482 = vpop.f32.mrb[0].mxu0
  %483 = vmatprep.mubr.bf16.mxu0 0
  %484 = vmatmul.mubr.bf16.gmra.mrb[0].mxu0 %v306
  %v485 = vpop.f32.mrb[0].mxu0
  %v486 = vadd.f32 0.0, %v485
  %v487 = vpop.f32.mrb[0].mxu0
  %v488 = vpop.f32.mrb[0].mxu0
  %v489 = vadd.f32 0.0, %v488
  %v490 = vpop.f32.mrb[0].mxu0
  %491 = vmatprep.mubr.bf16.mxu0 0
  %492 = vmatmul.mubr.bf16.gmra.mrb[0].mxu0 %v309
  %v493 = vpop.f32.mrb[0].mxu0
  %v494 = vadd.f32 0.0, %v493
  %v495 = vpop.f32.mrb[0].mxu0
  %v496 = vpop.f32.mrb[0].mxu0
  %v497 = vadd.f32 0.0, %v496
  %v498 = vpop.f32.mrb[0].mxu0
  %499 = vmatprep.mubr.bf16.mxu0 0
  %500 = vmatmul.mubr.bf16.gmra.mrb[0].mxu0 %v312
  %v501 = vpop.f32.mrb[0].mxu0
  %v502 = vadd.f32 0.0, %v501
  %v503 = vpop.f32.mrb[0].mxu0
  %v504 = vpop.f32.mrb[0].mxu0
  %v505 = vadd.f32 0.0, %v504
  %v506 = vpop.f32.mrb[0].mxu0
  %507 = vmatprep.mubr.bf16.mxu0 0
  %508 = vmatmul.mubr.bf16.gmra.mrb[0].mxu0 %v315
  %v509 = vpop.f32.mrb[0].mxu0
  %v510 = vadd.f32 0.0, %v509
  %v511 = vpop.f32.mrb[0].mxu0
  %v512 = vpop.f32.mrb[0].mxu0
  %v513 = vadd.f32 0.0, %v512
  %v514 = vpop.f32.mrb[0].mxu0
  %515 = vmatprep.mubr.bf16.mxu0 0
  %516 = vmatmul.mubr.bf16.gmra.mrb[0].mxu0 %v318
  %v517 = vpop.f32.mrb[0].mxu0
  %v518 = vadd.f32 0.0, %v517
  %v519 = vpop.f32.mrb[0].mxu0
  %v520 = vpop.f32.mrb[0].mxu0
  %v521 = vadd.f32 0.0, %v520
  %v522 = vpop.f32.mrb[0].mxu0
  %523 = vmatprep.mubr.bf16.mxu0 0
  %524 = vmatmul.mubr.bf16.gmra.mrb[0].mxu0 %v321
  %v525 = vpop.f32.mrb[0].mxu0
  %v526 = vadd.f32 0.0, %v525
  %v527 = vpop.f32.mrb[0].mxu0
  %v528 = vpop.f32.mrb[0].mxu0
  %v529 = vadd.f32 0.0, %v528
  %v530 = vpop.f32.mrb[0].mxu0
  %531 = vmatprep.mubr.bf16.mxu0 0
  %532 = vmatmul.mubr.bf16.gmra.mrb[0].mxu0 %v324
  %v533 = vpop.f32.mrb[0].mxu0
  %v534 = vadd.f32 0.0, %v533
  %v535 = vpop.f32.mrb[0].mxu0
  %v536 = vpop.f32.mrb[0].mxu0
  %v537 = vadd.f32 0.0, %v536
  %v538 = vpop.f32.mrb[0].mxu0
  %539 = vmatprep.mubr.bf16.mxu0 0
  %540 = vmatmul.mubr.bf16.gmra.mrb[0].mxu0 %v327
  %v541 = vpop.f32.mrb[0].mxu0
  %v542 = vadd.f32 0.0, %v541
  %v543 = vpop.f32.mrb[0].mxu0
  %v544 = vpop.f32.mrb[0].mxu0
  %v545 = vadd.f32 0.0, %v544
  %v546 = vpop.f32.mrb[0].mxu0
  %547 = vmatprep.mubr.bf16.mxu0 0
  %548 = vmatmul.mubr.bf16.gmra.mrb[0].mxu0 %v330
  %v549 = vpop.f32.mrb[0].mxu0
  %v550 = vadd.f32 0.0, %v549
  %v551 = vpop.f32.mrb[0].mxu0
  %v552 = vpop.f32.mrb[0].mxu0
  %v553 = vadd.f32 0.0, %v552
  %v554 = vpop.f32.mrb[0].mxu0
  %555 = vmatprep.mubr.bf16.mxu0 0
  %556 = vmatmul.mubr.bf16.gmra.mrb[0].mxu0 %v333
  %v557 = vpop.f32.mrb[0].mxu0
  %v558 = vadd.f32 0.0, %v557
  %v559 = vpop.f32.mrb[0].mxu0
  %v560 = vpop.f32.mrb[0].mxu0
  %v561 = vadd.f32 0.0, %v560
  %v562 = vpop.f32.mrb[0].mxu0
  %563 = vmatprep.mubr.bf16.mxu0 0
  %564 = vmatmul.mubr.bf16.gmra.mrb[0].mxu0 %v336
  %v565 = vpop.f32.mrb[0].mxu0
  %v566 = vadd.f32 0.0, %v565
  %v567 = vpop.f32.mrb[0].mxu0
  %v568 = vpop.f32.mrb[0].mxu0
  %v569 = vadd.f32 0.0, %v568
  %v570 = vpop.f32.mrb[0].mxu0
  %571 = vmatprep.mubr.bf16.mxu0 0
  %572 = vmatmul.mubr.bf16.gmra.mrb[0].mxu0 %v339
  %v573 = vpop.f32.mrb[0].mxu0
  %v574 = vadd.f32 0.0, %v573
  %v575 = vpop.f32.mrb[0].mxu0
  %v576 = vpop.f32.mrb[0].mxu0
  %v577 = vadd.f32 0.0, %v576
  %v578 = vpop.f32.mrb[0].mxu0
  %579 = vmatprep.mubr.bf16.mxu0 0
  %580 = vmatmul.mubr.bf16.gmra.mrb[0].mxu0 %v342
  %v581 = vpop.f32.mrb[0].mxu0
  %v582 = vadd.f32 0.0, %v581
  %v583 = vpop.f32.mrb[0].mxu0
  %v584 = vpop.f32.mrb[0].mxu0
  %v585 = vadd.f32 0.0, %v584
  %v586 = vpop.f32.mrb[0].mxu0
  %587 = vmatprep.mubr.bf16.mxu0 0
  %588 = vmatmul.mubr.bf16.gmra.mrb[0].mxu0 %v345
  %v589 = vpop.f32.mrb[0].mxu0
  %v590 = vadd.f32 0.0, %v589
  %v591 = vpop.f32.mrb[0].mxu0
  %v592 = vpop.f32.mrb[0].mxu0
  %v593 = vadd.f32 0.0, %v592
  %v594 = vpop.f32.mrb[0].mxu0
  %595 = vmatprep.mubr.bf16.mxu0 0
  %596 = vmatmul.mubr.bf16.gmra.mrb[0].mxu0 %v348
  %v597 = vpop.f32.mrb[0].mxu0
  %v598 = vadd.f32 0.0, %v597
  %v599 = vpop.f32.mrb[0].mxu0
  %v600 = vpop.f32.mrb[0].mxu0
  %v601 = vadd.f32 0.0, %v600
  %v602 = vpop.f32.mrb[0].mxu0
  %603 = vmatprep.mubr.bf16.mxu0 0
  %604 = vmatmul.mubr.bf16.gmra.mrb[0].mxu0 %v351
  %v605 = vpop.f32.mrb[0].mxu0
  %v606 = vadd.f32 0.0, %v605
  %v607 = vpop.f32.mrb[0].mxu0
  %v608 = vpop.f32.mrb[0].mxu0
  %v609 = vadd.f32 0.0, %v608
  %v610 = vpop.f32.mrb[0].mxu0
  %611 = vmatprep.mubr.bf16.mxu0 0
  %612 = vmatmul.mubr.bf16.gmra.mrb[0].mxu0 %v354
  %v613 = vpop.f32.mrb[0].mxu0
  %v614 = vadd.f32 0.0, %v613
  %v615 = vpop.f32.mrb[0].mxu0
  %v616 = vpop.f32.mrb[0].mxu0
  %v617 = vadd.f32 0.0, %v616
  %v618 = vpop.f32.mrb[0].mxu0
  %619 = vmatprep.mubr.bf16.mxu0 0
  %620 = vmatmul.mubr.bf16.gmra.mrb[0].mxu0 %v357
  %v621 = vpop.f32.mrb[0].mxu0
  %v622 = vadd.f32 0.0, %v621
  %v623 = vpop.f32.mrb[0].mxu0
  %v624 = vpop.f32.mrb[0].mxu0
  %v625 = vadd.f32 0.0, %v624
  %v626 = vpop.f32.mrb[0].mxu0
  %627 = vmatprep.mubr.bf16.mxu0 0
  %628 = vmatmul.mubr.bf16.gmra.mrb[0].mxu0 %v360
  %v629 = vpop.f32.mrb[0].mxu0
  %v630 = vadd.f32 0.0, %v629
  %v631 = vpop.f32.mrb[0].mxu0
  %v632 = vpop.f32.mrb[0].mxu0
  %v633 = vadd.f32 0.0, %v632
  %v634 = vpop.f32.mrb[0].mxu0
  %635 = vmatprep.mubr.bf16.mxu0 0
  %636 = vmatmul.mubr.bf16.gmra.mrb[0].mxu0 %v363
  %v637 = vpop.f32.mrb[0].mxu0
  %v638 = vadd.f32 0.0, %v637
  %v639 = vpop.f32.mrb[0].mxu0
  %v640 = vpop.f32.mrb[0].mxu0
  %v641 = vadd.f32 0.0, %v640
  %v642 = vpop.f32.mrb[0].mxu0
  %643 = vmatprep.mubr.bf16.mxu0 0
  %644 = vmatmul.mubr.bf16.gmra.mrb[0].mxu0 %v366
  %v645 = vpop.f32.mrb[0].mxu0
  %v646 = vadd.f32 0.0, %v645
  %v647 = vpop.f32.mrb[0].mxu0
  %v648 = vpop.f32.mrb[0].mxu0
  %v649 = vadd.f32 0.0, %v648
  %v650 = vpop.f32.mrb[0].mxu0
  %651 = vmatprep.mubr.bf16.mxu0 0
  %652 = vmatmul.mubr.bf16.gmra.mrb[0].mxu0 %v369
  %v653 = vpop.f32.mrb[0].mxu0
  %v654 = vadd.f32 0.0, %v653
  %v655 = vpop.f32.mrb[0].mxu0
  %v656 = vpop.f32.mrb[0].mxu0
  %v657 = vadd.f32 0.0, %v656
  %v658 = vpop.f32.mrb[0].mxu0
  %659 = vdwg.mxu0
  %v660 = vld [vmem:[%s2] sm:$0x1]
  %v661 = vadd.f32 %v406, %v409
  %v662 = vadd.f32 %v661, %v414
  %v663 = vadd.f32 %v662, %v417
  %v664 = vadd.f32 %v663, %v422
  %v665 = vadd.f32 %v664, %v425
  %v666 = vadd.f32 %v665, %v430
  %v667 = vadd.f32 %v666, %v433
  %v668 = vadd.f32 %v667, %v438
  %v669 = vadd.f32 %v668, %v441
  %v670 = vadd.f32 %v669, %v446
  %v671 = vadd.f32 %v670, %v449
  %v672 = vadd.f32 %v671, %v454
  %v673 = vadd.f32 %v672, %v457
  %v674 = vadd.f32 %v673, %v462
  %v675 = vadd.f32 %v674, %v465
  %v676 = vadd.f32 %v675, %v470
  %v677 = vadd.f32 %v676, %v473
  %v678 = vadd.f32 %v677, %v478
  %v679 = vadd.f32 %v678, %v481
  %v680 = vadd.f32 %v679, %v486
  %v681 = vadd.f32 %v680, %v489
  %v682 = vadd.f32 %v681, %v494
  %v683 = vadd.f32 %v682, %v497
  %v684 = vadd.f32 %v683, %v502
  %v685 = vadd.f32 %v684, %v505
  %v686 = vadd.f32 %v685, %v510
  %v687 = vadd.f32 %v686, %v513
  %v688 = vadd.f32 %v687, %v518
  %v689 = vadd.f32 %v688, %v521
  %v690 = vadd.f32 %v689, %v526
  %v691 = vadd.f32 %v690, %v529
  %v692 = vadd.f32 %v691, %v534
  %v693 = vadd.f32 %v692, %v537
  %v694 = vadd.f32 %v693, %v542
  %v695 = vadd.f32 %v694, %v545
  %v696 = vadd.f32 %v695, %v550
  %v697 = vadd.f32 %v696, %v553
  %v698 = vadd.f32 %v697, %v558
  %v699 = vadd.f32 %v698, %v561
  %v700 = vadd.f32 %v699, %v566
  %v701 = vadd.f32 %v700, %v569
  %v702 = vadd.f32 %v701, %v574
  %v703 = vadd.f32 %v702, %v577
  %v704 = vadd.f32 %v703, %v582
  %v705 = vadd.f32 %v704, %v585
  %v706 = vadd.f32 %v705, %v590
  %v707 = vadd.f32 %v706, %v593
  %v708 = vadd.f32 %v707, %v598
  %v709 = vadd.f32 %v708, %v601
  %v710 = vadd.f32 %v709, %v606
  %v711 = vadd.f32 %v710, %v609
  %v712 = vadd.f32 %v711, %v614
  %v713 = vadd.f32 %v712, %v617
  %v714 = vadd.f32 %v713, %v622
  %v715 = vadd.f32 %v714, %v625
  %v716 = vadd.f32 %v715, %v630
  %v717 = vadd.f32 %v716, %v633
  %v718 = vadd.f32 %v717, %v638
  %v719 = vadd.f32 %v718, %v641
  %v720 = vadd.f32 %v719, %v646
  %v721 = vadd.f32 %v720, %v649
  %v722 = vadd.f32 %v721, %v654
  %v723 = vadd.f32 %v722, %v657
  %v724 = vrot.slane %v723, 4
  %v725 = vadd.f32 %v723, %v724
  %v726 = vrot.slane %v725, 2
  %v727 = vadd.f32 %v725, %v726
  %v728 = vrot.slane %v727, 1
  %v729 = vadd.f32 %v727, %v728
  %v730 = vadd.f32 %v660, %v729
  %731 = vst [vmem:[%s2] sm:$0x1] %v730
  %v732 = vld [vmem:[%s3] sm:$0x1]
  %v733 = vmul.f32 %v406, %v406
  %v734 = vmul.f32 %v409, %v409
  %v735 = vmul.f32 %v414, %v414
  %v736 = vmul.f32 %v417, %v417
  %v737 = vmul.f32 %v422, %v422
  %v738 = vmul.f32 %v425, %v425
  %v739 = vmul.f32 %v430, %v430
  %v740 = vmul.f32 %v433, %v433
  %v741 = vmul.f32 %v438, %v438
  %v742 = vmul.f32 %v441, %v441
  %v743 = vmul.f32 %v446, %v446
  %v744 = vmul.f32 %v449, %v449
  %v745 = vmul.f32 %v454, %v454
  %v746 = vmul.f32 %v457, %v457
  %v747 = vmul.f32 %v462, %v462
  %v748 = vmul.f32 %v465, %v465
  %v749 = vmul.f32 %v470, %v470
  %v750 = vmul.f32 %v473, %v473
  %v751 = vmul.f32 %v478, %v478
  %v752 = vmul.f32 %v481, %v481
  %v753 = vmul.f32 %v486, %v486
  %v754 = vmul.f32 %v489, %v489
  %v755 = vmul.f32 %v494, %v494
  %v756 = vmul.f32 %v497, %v497
  %v757 = vmul.f32 %v502, %v502
  %v758 = vmul.f32 %v505, %v505
  %v759 = vmul.f32 %v510, %v510
  %v760 = vmul.f32 %v513, %v513
  %v761 = vmul.f32 %v518, %v518
  %v762 = vmul.f32 %v521, %v521
  %v763 = vmul.f32 %v526, %v526
  %v764 = vmul.f32 %v529, %v529
  %v765 = vmul.f32 %v534, %v534
  %v766 = vmul.f32 %v537, %v537
  %v767 = vmul.f32 %v542, %v542
  %v768 = vmul.f32 %v545, %v545
  %v769 = vmul.f32 %v550, %v550
  %v770 = vmul.f32 %v553, %v553
  %v771 = vmul.f32 %v558, %v558
  %v772 = vmul.f32 %v561, %v561
  %v773 = vmul.f32 %v566, %v566
  %v774 = vmul.f32 %v569, %v569
  %v775 = vmul.f32 %v574, %v574
  %v776 = vmul.f32 %v577, %v577
  %v777 = vmul.f32 %v582, %v582
  %v778 = vmul.f32 %v585, %v585
  %v779 = vmul.f32 %v590, %v590
  %v780 = vmul.f32 %v593, %v593
  %v781 = vmul.f32 %v598, %v598
  %v782 = vmul.f32 %v601, %v601
  %v783 = vmul.f32 %v606, %v606
  %v784 = vmul.f32 %v609, %v609
  %v785 = vmul.f32 %v614, %v614
  %v786 = vmul.f32 %v617, %v617
  %v787 = vmul.f32 %v622, %v622
  %v788 = vmul.f32 %v625, %v625
  %v789 = vmul.f32 %v630, %v630
  %v790 = vmul.f32 %v633, %v633
  %v791 = vmul.f32 %v638, %v638
  %v792 = vmul.f32 %v641, %v641
  %v793 = vmul.f32 %v646, %v646
  %v794 = vmul.f32 %v649, %v649
  %v795 = vmul.f32 %v654, %v654
  %v796 = vmul.f32 %v657, %v657
  %v797 = vadd.f32 %v733, %v734
  %v798 = vadd.f32 %v797, %v735
  %v799 = vadd.f32 %v798, %v736
  %v800 = vadd.f32 %v799, %v737
  %v801 = vadd.f32 %v800, %v738
  %v802 = vadd.f32 %v801, %v739
  %v803 = vadd.f32 %v802, %v740
  %v804 = vadd.f32 %v803, %v741
  %v805 = vadd.f32 %v804, %v742
  %v806 = vadd.f32 %v805, %v743
  %v807 = vadd.f32 %v806, %v744
  %v808 = vadd.f32 %v807, %v745
  %v809 = vadd.f32 %v808, %v746
  %v810 = vadd.f32 %v809, %v747
  %v811 = vadd.f32 %v810, %v748
  %v812 = vadd.f32 %v811, %v749
  %v813 = vadd.f32 %v812, %v750
  %v814 = vadd.f32 %v813, %v751
  %v815 = vadd.f32 %v814, %v752
  %v816 = vadd.f32 %v815, %v753
  %v817 = vadd.f32 %v816, %v754
  %v818 = vadd.f32 %v817, %v755
  %v819 = vadd.f32 %v818, %v756
  %v820 = vadd.f32 %v819, %v757
  %v821 = vadd.f32 %v820, %v758
  %v822 = vadd.f32 %v821, %v759
  %v823 = vadd.f32 %v822, %v760
  %v824 = vadd.f32 %v823, %v761
  %v825 = vadd.f32 %v824, %v762
  %v826 = vadd.f32 %v825, %v763
  %v827 = vadd.f32 %v826, %v764
  %v828 = vadd.f32 %v827, %v765
  %v829 = vadd.f32 %v828, %v766
  %v830 = vadd.f32 %v829, %v767
  %v831 = vadd.f32 %v830, %v768
  %v832 = vadd.f32 %v831, %v769
  %v833 = vadd.f32 %v832, %v770
  %v834 = vadd.f32 %v833, %v771
  %v835 = vadd.f32 %v834, %v772
  %v836 = vadd.f32 %v835, %v773
  %v837 = vadd.f32 %v836, %v774
  %v838 = vadd.f32 %v837, %v775
  %v839 = vadd.f32 %v838, %v776
  %v840 = vadd.f32 %v839, %v777
  %v841 = vadd.f32 %v840, %v778
  %v842 = vadd.f32 %v841, %v779
  %v843 = vadd.f32 %v842, %v780
  %v844 = vadd.f32 %v843, %v781
  %v845 = vadd.f32 %v844, %v782
  %v846 = vadd.f32 %v845, %v783
  %v847 = vadd.f32 %v846, %v784
  %v848 = vadd.f32 %v847, %v785
  %v849 = vadd.f32 %v848, %v786
  %v850 = vadd.f32 %v849, %v787
  %v851 = vadd.f32 %v850, %v788
  %v852 = vadd.f32 %v851, %v789
  %v853 = vadd.f32 %v852, %v790
  %v854 = vadd.f32 %v853, %v791
  %v855 = vadd.f32 %v854, %v792
  %v856 = vadd.f32 %v855, %v793
  %v857 = vadd.f32 %v856, %v794
  %v858 = vadd.f32 %v857, %v795
  %v859 = vadd.f32 %v858, %v796
  %v860 = vrot.slane %v859, 4
  %v861 = vadd.f32 %v859, %v860
  %v862 = vrot.slane %v861, 2
  %v863 = vadd.f32 %v861, %v862
  %v864 = vrot.slane %v863, 1
  %v865 = vadd.f32 %v863, %v864
  %v866 = vadd.f32 %v732, %v865
  %867 = vst [vmem:[%s3] sm:$0x1] %v866
  // Predicated region
  $region14: #{conv_block_forward.2} parent=0 // pred_check
    _
  $region15: #{conv_block_forward.2} parent=0 // pred_check_branch
    %869 = sbr.rel (0) target = $region17
  $region16: #{conv_block_forward.2} parent=0 // pred_region
    _
  $region17: #{conv_block_forward.2} parent=0 // pred_fallthru
    _
  // Predicated region
  $region18: #{conv_block_forward.2} parent=0 // pred_check
    _
  $region19: #{conv_block_forward.2} parent=0 // pred_check_branch
    %871 = sbr.rel (0) target = $region21
  $region20: #{conv_block_forward.2} parent=0 // pred_region
    _
  $region21: #{conv_block_forward.2} parent=0 // pred_fallthru
    _
  // Predicated region
  $region22: #{conv_block_forward.2} parent=0 // pred_check
    _
  $region23: #{conv_block_forward.2} parent=0 // pred_check_branch
    %873 = sbr.rel (0) target = $region25
  $region24: #{conv_block_forward.2} parent=0 // pred_region
    _
  $region25: #{conv_block_forward.2} parent=0 // pred_fallthru
    _
  // Predicated region
  $region26: #{conv_block_forward.2} parent=0 // pred_check
    _
  $region27: #{conv_block_forward.2} parent=0 // pred_check_branch
    %875 = sbr.rel (0) target = $region29
  $region28: #{conv_block_forward.2} parent=0 // pred_region
    _
  $region29: #{conv_block_forward.2} parent=0 // pred_fallthru
    _

// kernel: conv_block_forward.3
$region0: #{conv_block_forward.3}
  #allocation0 [shape = 'u32[]', space=smem, size = 0x4, offset = 0x4, fixed_abs, tag = 'smem constant byte address 0x4 - core index']
  #allocation1 [shape = 'u32[144,128]{1,0:T(1,128)}', space=vmem, size = 0x12000, scoped, tag = 'internal scratch']
  %s0 = inlined_call_operand.vmem [shape: bf16[512,16], index: 0, kind: input, shape index: {}]
  %s1 = inlined_call_operand.vmem [shape: bf16[16,128], index: 1, kind: input, shape index: {}]
  %s2 = inlined_call_operand.vmem [shape: f32[8,128], index: 2, kind: input, shape index: {}]
  %s3 = inlined_call_operand.vmem [shape: f32[8,128], index: 3, kind: input, shape index: {}]
  %s4 = inlined_call_operand.vmem [shape: f32[1,128], index: 4, kind: input, shape index: {}]
  %s5 = inlined_call_operand.vmem [shape: f32[1,128], index: 5, kind: input, shape index: {}]
  %s6 = inlined_call_operand.vmem [shape: f32[512,128], index: 6, kind: output, shape index: {}]
  %s7 = sld [smem:[#allocation0]]
  $region34: #{conv_block_forward.3} parent=0
    _
  %s9 = ssub.s32 1, %s7
  %s10 = scalar_select 0, %s9, %s7
  // Predicated region
  $region2: #{conv_block_forward.3} parent=0 // pred_check
    _
  $region3: #{conv_block_forward.3} parent=0 // pred_check_branch
    %12 = sbr.rel (0) target = $region5
  $region4: #{conv_block_forward.3} parent=0 // pred_region
    _
  $region5: #{conv_block_forward.3} parent=0 // pred_fallthru
    _
  // Predicated region
  $region6: #{conv_block_forward.3} parent=0 // pred_check
    _
  $region7: #{conv_block_forward.3} parent=0 // pred_check_branch
    %14 = sbr.rel (0) target = $region9
  $region8: #{conv_block_forward.3} parent=0 // pred_region
    _
  $region9: #{conv_block_forward.3} parent=0 // pred_fallthru
    _
  // Predicated region
  $region10: #{conv_block_forward.3} parent=0 // pred_check
    _
  $region11: #{conv_block_forward.3} parent=0 // pred_check_branch
    %16 = sbr.rel (0) target = $region13
  $region12: #{conv_block_forward.3} parent=0 // pred_region
    _
  $region13: #{conv_block_forward.3} parent=0 // pred_fallthru
    _
  // Predicated region
  $region14: #{conv_block_forward.3} parent=0 // pred_check
    _
  $region15: #{conv_block_forward.3} parent=0 // pred_check_branch
    %18 = sbr.rel (0) target = $region17
  $region16: #{conv_block_forward.3} parent=0 // pred_region
    _
  $region17: #{conv_block_forward.3} parent=0 // pred_fallthru
    _
  // Predicated region
  $region18: #{conv_block_forward.3} parent=0 // pred_check
    _
  $region19: #{conv_block_forward.3} parent=0 // pred_check_branch
    %20 = sbr.rel (0) target = $region21
  $region20: #{conv_block_forward.3} parent=0 // pred_region
    _
  $region21: #{conv_block_forward.3} parent=0 // pred_fallthru
    _
  // Predicated region
  $region22: #{conv_block_forward.3} parent=0 // pred_check
    _
  $region23: #{conv_block_forward.3} parent=0 // pred_check_branch
    %22 = sbr.rel (0) target = $region25
  $region24: #{conv_block_forward.3} parent=0 // pred_region
    _
  $region25: #{conv_block_forward.3} parent=0 // pred_fallthru
    _
  %v24 = vld [vmem:[%s2] sm:$0xff]
  %v25 = vrot.slane %v24, 4
  %v26 = vadd.f32 %v24, %v25
  %v27 = vrot.slane %v26, 2
  %v28 = vadd.f32 %v26, %v27
  %v29 = vrot.slane %v28, 1
  %v30 = vadd.f32 %v28, %v29
  %v31 = vld [vmem:[%s3] sm:$0xff]
  %v32 = vrot.slane %v31, 4
  %v33 = vadd.f32 %v31, %v32
  %v34 = vrot.slane %v33, 2
  %v35 = vadd.f32 %v33, %v34
  %v36 = vrot.slane %v35, 1
  %v37 = vadd.f32 %v35, %v36
  %v38 = vmul.f32 %v30, 0.001953125
  %v39 = vmul.f32 %v37, 0.001953125
  %v40 = vmul.f32 %v38, %v38
  %v41 = vsub.f32 %v39, %v40
  %v42 = vmax.f32 %v41, 0.0
  %v43 = vadd.f32 %v42, 1e-05
  %v44 = vrsqrt.pop %v43
  %v45 = vld [vmem:[%s4] sm:$0x1]
  %v46 = vmul.f32 %v45, %v44
  %v47 = vld [vmem:[%s5] sm:$0x1]
  %v48 = vmul.f32 %v38, %v46
  %v49 = vsub.f32 %v47, %v48
  %v50 = vld [vmem:[%s0] sm:$0xf]
  %v51 = vld [vmem:[%s0 + $0x4] sm:$0xf]
  %v52 = vld [vmem:[%s0 + $0x8] sm:$0xf]
  %v53 = vld [vmem:[%s0 + $0xc] sm:$0xf]
  %v54 = vld [vmem:[%s0 + $0x10] sm:$0xf]
  %v55 = vld [vmem:[%s0 + $0x14] sm:$0xf]
  %v56 = vld [vmem:[%s0 + $0x18] sm:$0xf]
  %v57 = vld [vmem:[%s0 + $0x1c] sm:$0xf]
  %v58 = vld [vmem:[%s0 + $0x20] sm:$0xf]
  %v59 = vld [vmem:[%s0 + $0x24] sm:$0xf]
  %v60 = vld [vmem:[%s0 + $0x28] sm:$0xf]
  %v61 = vld [vmem:[%s0 + $0x2c] sm:$0xf]
  %v62 = vld [vmem:[%s0 + $0x30] sm:$0xf]
  %v63 = vld [vmem:[%s0 + $0x34] sm:$0xf]
  %v64 = vld [vmem:[%s0 + $0x38] sm:$0xf]
  %v65 = vld [vmem:[%s0 + $0x3c] sm:$0xf]
  %v66 = vld [vmem:[%s0 + $0x40] sm:$0xf]
  %v67 = vld [vmem:[%s0 + $0x44] sm:$0xf]
  %v68 = vld [vmem:[%s0 + $0x48] sm:$0xf]
  %v69 = vld [vmem:[%s0 + $0x4c] sm:$0xf]
  %v70 = vld [vmem:[%s0 + $0x50] sm:$0xf]
  %v71 = vld [vmem:[%s0 + $0x54] sm:$0xf]
  %v72 = vld [vmem:[%s0 + $0x58] sm:$0xf]
  %v73 = vld [vmem:[%s0 + $0x5c] sm:$0xf]
  %v74 = vld [vmem:[%s0 + $0x60] sm:$0xf]
  %v75 = vld [vmem:[%s0 + $0x64] sm:$0xf]
  %v76 = vld [vmem:[%s0 + $0x68] sm:$0xf]
  %v77 = vld [vmem:[%s0 + $0x6c] sm:$0xf]
  %v78 = vld [vmem:[%s0 + $0x70] sm:$0xf]
  %v79 = vld [vmem:[%s0 + $0x74] sm:$0xf]
  %v80 = vld [vmem:[%s0 + $0x78] sm:$0xf]
  %v81 = vld [vmem:[%s0 + $0x7c] sm:$0xf]
  %v82 = vld [vmem:[%s0 + $0x80] sm:$0xf]
  %v83 = vld [vmem:[%s0 + $0x84] sm:$0xf]
  %v84 = vld [vmem:[%s0 + $0x88] sm:$0xf]
  %v85 = vld [vmem:[%s0 + $0x8c] sm:$0xf]
  %v86 = vld [vmem:[%s0 + $0x90] sm:$0xf]
  %v87 = vld [vmem:[%s0 + $0x94] sm:$0xf]
  %v88 = vld [vmem:[%s0 + $0x98] sm:$0xf]
  %v89 = vld [vmem:[%s0 + $0x9c] sm:$0xf]
  %v90 = vld [vmem:[%s0 + $0xa0] sm:$0xf]
  %v91 = vld [vmem:[%s0 + $0xa4] sm:$0xf]
  %v92 = vld [vmem:[%s0 + $0xa8] sm:$0xf]
  %v93 = vld [vmem:[%s0 + $0xac] sm:$0xf]
  %v94 = vld [vmem:[%s0 + $0xb0] sm:$0xf]
  %v95 = vld [vmem:[%s0 + $0xb4] sm:$0xf]
  %v96 = vld [vmem:[%s0 + $0xb8] sm:$0xf]
  %v97 = vld [vmem:[%s0 + $0xbc] sm:$0xf]
  %v98 = vld [vmem:[%s0 + $0xc0] sm:$0xf]
  %v99 = vld [vmem:[%s0 + $0xc4] sm:$0xf]
  %v100 = vld [vmem:[%s0 + $0xc8] sm:$0xf]
  %v101 = vld [vmem:[%s0 + $0xcc] sm:$0xf]
  %v102 = vld [vmem:[%s0 + $0xd0] sm:$0xf]
  %v103 = vld [vmem:[%s0 + $0xd4] sm:$0xf]
  %v104 = vld [vmem:[%s0 + $0xd8] sm:$0xf]
  %v105 = vld [vmem:[%s0 + $0xdc] sm:$0xf]
  %v106 = vld [vmem:[%s0 + $0xe0] sm:$0xf]
  %v107 = vld [vmem:[%s0 + $0xe4] sm:$0xf]
  %v108 = vld [vmem:[%s0 + $0xe8] sm:$0xf]
  %v109 = vld [vmem:[%s0 + $0xec] sm:$0xf]
  %v110 = vld [vmem:[%s0 + $0xf0] sm:$0xf]
  %v111 = vld [vmem:[%s0 + $0xf4] sm:$0xf]
  %v112 = vld [vmem:[%s0 + $0xf8] sm:$0xf]
  %v113 = vld [vmem:[%s0 + $0xfc] sm:$0xf]
  %v114 = vld [vmem:[%s1] sm:$0xf]
  %v115 = vld [vmem:[%s1 + $0x4] sm:$0xf]
  %v180 = vunpack.c.l.b16 %v50
  %v181 = vunpack.c.l.b16 %v51
  %v182 = vunpack.c.l.b16 %v52
  %v183 = vunpack.c.l.b16 %v53
  %v184 = vunpack.c.l.b16 %v54
  %v185 = vunpack.c.l.b16 %v55
  %v186 = vunpack.c.l.b16 %v56
  %v187 = vunpack.c.l.b16 %v57
  %v188 = vunpack.c.l.b16 %v58
  %v189 = vunpack.c.l.b16 %v59
  %v190 = vunpack.c.l.b16 %v60
  %v191 = vunpack.c.l.b16 %v61
  %v192 = vunpack.c.l.b16 %v62
  %v193 = vunpack.c.l.b16 %v63
  %v194 = vunpack.c.l.b16 %v64
  %v195 = vunpack.c.l.b16 %v65
  %v196 = vunpack.c.l.b16 %v66
  %v197 = vunpack.c.l.b16 %v67
  %v198 = vunpack.c.l.b16 %v68
  %v199 = vunpack.c.l.b16 %v69
  %v200 = vunpack.c.l.b16 %v70
  %v201 = vunpack.c.l.b16 %v71
  %v202 = vunpack.c.l.b16 %v72
  %v203 = vunpack.c.l.b16 %v73
  %v204 = vunpack.c.l.b16 %v74
  %v205 = vunpack.c.l.b16 %v75
  %v206 = vunpack.c.l.b16 %v76
  %v207 = vunpack.c.l.b16 %v77
  %v208 = vunpack.c.l.b16 %v78
  %v209 = vunpack.c.l.b16 %v79
  %v210 = vunpack.c.l.b16 %v80
  %v211 = vunpack.c.l.b16 %v81
  %v212 = vunpack.c.l.b16 %v82
  %v213 = vunpack.c.l.b16 %v83
  %v214 = vunpack.c.l.b16 %v84
  %v215 = vunpack.c.l.b16 %v85
  %v216 = vunpack.c.l.b16 %v86
  %v217 = vunpack.c.l.b16 %v87
  %v218 = vunpack.c.l.b16 %v88
  %v219 = vunpack.c.l.b16 %v89
  %v220 = vunpack.c.l.b16 %v90
  %v221 = vunpack.c.l.b16 %v91
  %v222 = vunpack.c.l.b16 %v92
  %v223 = vunpack.c.l.b16 %v93
  %v224 = vunpack.c.l.b16 %v94
  %v225 = vunpack.c.l.b16 %v95
  %v226 = vunpack.c.l.b16 %v96
  %v227 = vunpack.c.l.b16 %v97
  %v228 = vunpack.c.l.b16 %v98
  %v229 = vunpack.c.l.b16 %v99
  %v230 = vunpack.c.l.b16 %v100
  %v231 = vunpack.c.l.b16 %v101
  %v232 = vunpack.c.l.b16 %v102
  %v233 = vunpack.c.l.b16 %v103
  %v234 = vunpack.c.l.b16 %v104
  %v235 = vunpack.c.l.b16 %v105
  %v236 = vunpack.c.l.b16 %v106
  %v237 = vunpack.c.l.b16 %v107
  %v238 = vunpack.c.l.b16 %v108
  %v239 = vunpack.c.l.b16 %v109
  %v240 = vunpack.c.l.b16 %v110
  %v241 = vunpack.c.l.b16 %v111
  %v242 = vunpack.c.l.b16 %v112
  %v243 = vunpack.c.l.b16 %v113
  %v244 = vpack.c.b16 %v181, %v180
  %v245 = vpack.c.b16 %v183, %v182
  %v246 = vpack.c.b16 %v185, %v184
  %v247 = vpack.c.b16 %v187, %v186
  %v248 = vpack.c.b16 %v189, %v188
  %v249 = vpack.c.b16 %v191, %v190
  %v250 = vpack.c.b16 %v193, %v192
  %v251 = vpack.c.b16 %v195, %v194
  %v252 = vpack.c.b16 %v197, %v196
  %v253 = vpack.c.b16 %v199, %v198
  %v254 = vpack.c.b16 %v201, %v200
  %v255 = vpack.c.b16 %v203, %v202
  %v256 = vpack.c.b16 %v205, %v204
  %v257 = vpack.c.b16 %v207, %v206
  %v258 = vpack.c.b16 %v209, %v208
  %v259 = vpack.c.b16 %v211, %v210
  %v260 = vpack.c.b16 %v213, %v212
  %v261 = vpack.c.b16 %v215, %v214
  %v262 = vpack.c.b16 %v217, %v216
  %v263 = vpack.c.b16 %v219, %v218
  %v264 = vpack.c.b16 %v221, %v220
  %v265 = vpack.c.b16 %v223, %v222
  %v266 = vpack.c.b16 %v225, %v224
  %v267 = vpack.c.b16 %v227, %v226
  %v268 = vpack.c.b16 %v229, %v228
  %v269 = vpack.c.b16 %v231, %v230
  %v270 = vpack.c.b16 %v233, %v232
  %v271 = vpack.c.b16 %v235, %v234
  %v272 = vpack.c.b16 %v237, %v236
  %v273 = vpack.c.b16 %v239, %v238
  %v274 = vpack.c.b16 %v241, %v240
  %v275 = vpack.c.b16 %v243, %v242
  %v278 = vunpack.c.l.b16 %v114
  %v279 = vunpack.c.l.b16 %v115
  %v280 = vpack.c.b16 %v279, %v278
  %vm282 = vcmask 130048
  %v284 = vsel %vm282, %v244, 0
  %v287 = vsel %vm282, %v245, 0
  %v290 = vsel %vm282, %v246, 0
  %v293 = vsel %vm282, %v247, 0
  %v296 = vsel %vm282, %v248, 0
  %v299 = vsel %vm282, %v249, 0
  %v302 = vsel %vm282, %v250, 0
  %v305 = vsel %vm282, %v251, 0
  %v308 = vsel %vm282, %v252, 0
  %v311 = vsel %vm282, %v253, 0
  %v314 = vsel %vm282, %v254, 0
  %v317 = vsel %vm282, %v255, 0
  %v320 = vsel %vm282, %v256, 0
  %v323 = vsel %vm282, %v257, 0
  %v326 = vsel %vm282, %v258, 0
  %v329 = vsel %vm282, %v259, 0
  %v332 = vsel %vm282, %v260, 0
  %v335 = vsel %vm282, %v261, 0
  %v338 = vsel %vm282, %v262, 0
  %v341 = vsel %vm282, %v263, 0
  %v344 = vsel %vm282, %v264, 0
  %v347 = vsel %vm282, %v265, 0
  %v350 = vsel %vm282, %v266, 0
  %v353 = vsel %vm282, %v267, 0
  %v356 = vsel %vm282, %v268, 0
  %v359 = vsel %vm282, %v269, 0
  %v362 = vsel %vm282, %v270, 0
  %v365 = vsel %vm282, %v271, 0
  %v368 = vsel %vm282, %v272, 0
  %v371 = vsel %vm282, %v273, 0
  %v374 = vsel %vm282, %v274, 0
  %v377 = vsel %vm282, %v275, 0
  %379 = vmatprep.subr.bf16.mxu0 0
  %380 = vmatpush1.bf16.msra.mxu0 %v280
  %381 = vmatprep.subr.bf16.mxu0 0
  %382 = vmatpush1.bf16.msra.mxu0 0
  %383 = vmatprep.subr.bf16.mxu0 0
  %384 = vmatpush1.bf16.msra.mxu0 0
  %385 = vmatprep.subr.bf16.mxu0 0
  %386 = vmatpush1.bf16.msra.mxu0 0
  %387 = vmatprep.subr.bf16.mxu0 0
  %388 = vmatpush1.bf16.msra.mxu0 0
  %389 = vmatprep.subr.bf16.mxu0 0
  %390 = vmatpush1.bf16.msra.mxu0 0
  %391 = vmatprep.subr.bf16.mxu0 0
  %392 = vmatpush1.bf16.msra.mxu0 0
  %393 = vmatprep.subr.bf16.mxu0 0
  %394 = vmatpush1.bf16.msra.mxu0 0
  %395 = vmatprep.subr.bf16.mxu0 0
  %396 = vmatpush1.bf16.msra.mxu0 0
  %397 = vmatprep.subr.bf16.mxu0 0
  %398 = vmatpush1.bf16.msra.mxu0 0
  %399 = vmatprep.subr.bf16.mxu0 0
  %400 = vmatpush1.bf16.msra.mxu0 0
  %401 = vmatprep.subr.bf16.mxu0 0
  %402 = vmatpush1.bf16.msra.mxu0 0
  %403 = vmatprep.subr.bf16.mxu0 0
  %404 = vmatpush1.bf16.msra.mxu0 0
  %405 = vmatprep.subr.bf16.mxu0 0
  %406 = vmatpush1.bf16.msra.mxu0 0
  %407 = vmatprep.subr.bf16.mxu0 0
  %408 = vmatpush1.bf16.msra.mxu0 0
  %409 = vmatprep.subr.bf16.mxu0 0
  %410 = vmatpush1.bf16.msra.mxu0 0
  %411 = vmatprep.mubr.bf16.mxu0 0
  %412 = vmatmul.mubr.bf16.gmra.mrb[0].mxu0 %v284
  %v413 = vpop.f32.mrb[0].mxu0
  %v414 = vadd.f32 0.0, %v413
  %v415 = vpop.f32.mrb[0].mxu0
  %v416 = vpop.f32.mrb[0].mxu0
  %v417 = vadd.f32 0.0, %v416
  %v418 = vpop.f32.mrb[0].mxu0
  %419 = vmatprep.mubr.bf16.mxu0 0
  %420 = vmatmul.mubr.bf16.gmra.mrb[0].mxu0 %v287
  %v421 = vpop.f32.mrb[0].mxu0
  %v422 = vadd.f32 0.0, %v421
  %v423 = vpop.f32.mrb[0].mxu0
  %v424 = vpop.f32.mrb[0].mxu0
  %v425 = vadd.f32 0.0, %v424
  %v426 = vpop.f32.mrb[0].mxu0
  %427 = vmatprep.mubr.bf16.mxu0 0
  %428 = vmatmul.mubr.bf16.gmra.mrb[0].mxu0 %v290
  %v429 = vpop.f32.mrb[0].mxu0
  %v430 = vadd.f32 0.0, %v429
  %v431 = vpop.f32.mrb[0].mxu0
  %v432 = vpop.f32.mrb[0].mxu0
  %v433 = vadd.f32 0.0, %v432
  %v434 = vpop.f32.mrb[0].mxu0
  %435 = vmatprep.mubr.bf16.mxu0 0
  %436 = vmatmul.mubr.bf16.gmra.mrb[0].mxu0 %v293
  %v437 = vpop.f32.mrb[0].mxu0
  %v438 = vadd.f32 0.0, %v437
  %v439 = vpop.f32.mrb[0].mxu0
  %v440 = vpop.f32.mrb[0].mxu0
  %v441 = vadd.f32 0.0, %v440
  %v442 = vpop.f32.mrb[0].mxu0
  %443 = vmatprep.mubr.bf16.mxu0 0
  %444 = vmatmul.mubr.bf16.gmra.mrb[0].mxu0 %v296
  %v445 = vpop.f32.mrb[0].mxu0
  %v446 = vadd.f32 0.0, %v445
  %v447 = vpop.f32.mrb[0].mxu0
  %v448 = vpop.f32.mrb[0].mxu0
  %v449 = vadd.f32 0.0, %v448
  %v450 = vpop.f32.mrb[0].mxu0
  %451 = vmatprep.mubr.bf16.mxu0 0
  %452 = vmatmul.mubr.bf16.gmra.mrb[0].mxu0 %v299
  %v453 = vpop.f32.mrb[0].mxu0
  %v454 = vadd.f32 0.0, %v453
  %v455 = vpop.f32.mrb[0].mxu0
  %v456 = vpop.f32.mrb[0].mxu0
  %v457 = vadd.f32 0.0, %v456
  %v458 = vpop.f32.mrb[0].mxu0
  %459 = vmatprep.mubr.bf16.mxu0 0
  %460 = vmatmul.mubr.bf16.gmra.mrb[0].mxu0 %v302
  %v461 = vpop.f32.mrb[0].mxu0
  %v462 = vadd.f32 0.0, %v461
  %v463 = vpop.f32.mrb[0].mxu0
  %v464 = vpop.f32.mrb[0].mxu0
  %v465 = vadd.f32 0.0, %v464
  %v466 = vpop.f32.mrb[0].mxu0
  %467 = vmatprep.mubr.bf16.mxu0 0
  %468 = vmatmul.mubr.bf16.gmra.mrb[0].mxu0 %v305
  %v469 = vpop.f32.mrb[0].mxu0
  %v470 = vadd.f32 0.0, %v469
  %v471 = vpop.f32.mrb[0].mxu0
  %v472 = vpop.f32.mrb[0].mxu0
  %v473 = vadd.f32 0.0, %v472
  %v474 = vpop.f32.mrb[0].mxu0
  %475 = vmatprep.mubr.bf16.mxu0 0
  %476 = vmatmul.mubr.bf16.gmra.mrb[0].mxu0 %v308
  %v477 = vpop.f32.mrb[0].mxu0
  %v478 = vadd.f32 0.0, %v477
  %v479 = vpop.f32.mrb[0].mxu0
  %v480 = vpop.f32.mrb[0].mxu0
  %v481 = vadd.f32 0.0, %v480
  %v482 = vpop.f32.mrb[0].mxu0
  %483 = vmatprep.mubr.bf16.mxu0 0
  %484 = vmatmul.mubr.bf16.gmra.mrb[0].mxu0 %v311
  %v485 = vpop.f32.mrb[0].mxu0
  %v486 = vadd.f32 0.0, %v485
  %v487 = vpop.f32.mrb[0].mxu0
  %v488 = vpop.f32.mrb[0].mxu0
  %v489 = vadd.f32 0.0, %v488
  %v490 = vpop.f32.mrb[0].mxu0
  %491 = vmatprep.mubr.bf16.mxu0 0
  %492 = vmatmul.mubr.bf16.gmra.mrb[0].mxu0 %v314
  %v493 = vpop.f32.mrb[0].mxu0
  %v494 = vadd.f32 0.0, %v493
  %v495 = vpop.f32.mrb[0].mxu0
  %v496 = vpop.f32.mrb[0].mxu0
  %v497 = vadd.f32 0.0, %v496
  %v498 = vpop.f32.mrb[0].mxu0
  %499 = vmatprep.mubr.bf16.mxu0 0
  %500 = vmatmul.mubr.bf16.gmra.mrb[0].mxu0 %v317
  %v501 = vpop.f32.mrb[0].mxu0
  %v502 = vadd.f32 0.0, %v501
  %v503 = vpop.f32.mrb[0].mxu0
  %v504 = vpop.f32.mrb[0].mxu0
  %v505 = vadd.f32 0.0, %v504
  %v506 = vpop.f32.mrb[0].mxu0
  %507 = vmatprep.mubr.bf16.mxu0 0
  %508 = vmatmul.mubr.bf16.gmra.mrb[0].mxu0 %v320
  %v509 = vpop.f32.mrb[0].mxu0
  %v510 = vadd.f32 0.0, %v509
  %v511 = vpop.f32.mrb[0].mxu0
  %v512 = vpop.f32.mrb[0].mxu0
  %v513 = vadd.f32 0.0, %v512
  %v514 = vpop.f32.mrb[0].mxu0
  %515 = vmatprep.mubr.bf16.mxu0 0
  %516 = vmatmul.mubr.bf16.gmra.mrb[0].mxu0 %v323
  %v517 = vpop.f32.mrb[0].mxu0
  %v518 = vadd.f32 0.0, %v517
  %v519 = vpop.f32.mrb[0].mxu0
  %v520 = vpop.f32.mrb[0].mxu0
  %v521 = vadd.f32 0.0, %v520
  %v522 = vpop.f32.mrb[0].mxu0
  %523 = vmatprep.mubr.bf16.mxu0 0
  %524 = vmatmul.mubr.bf16.gmra.mrb[0].mxu0 %v326
  %v525 = vpop.f32.mrb[0].mxu0
  %v526 = vadd.f32 0.0, %v525
  %v527 = vpop.f32.mrb[0].mxu0
  %v528 = vpop.f32.mrb[0].mxu0
  %v529 = vadd.f32 0.0, %v528
  %v530 = vpop.f32.mrb[0].mxu0
  %531 = vmatprep.mubr.bf16.mxu0 0
  %532 = vmatmul.mubr.bf16.gmra.mrb[0].mxu0 %v329
  %v533 = vpop.f32.mrb[0].mxu0
  %v534 = vadd.f32 0.0, %v533
  %v535 = vpop.f32.mrb[0].mxu0
  %v536 = vpop.f32.mrb[0].mxu0
  %v537 = vadd.f32 0.0, %v536
  %v538 = vpop.f32.mrb[0].mxu0
  %539 = vmatprep.mubr.bf16.mxu0 0
  %540 = vmatmul.mubr.bf16.gmra.mrb[0].mxu0 %v332
  %v541 = vpop.f32.mrb[0].mxu0
  %v542 = vadd.f32 0.0, %v541
  %v543 = vpop.f32.mrb[0].mxu0
  %v544 = vpop.f32.mrb[0].mxu0
  %v545 = vadd.f32 0.0, %v544
  %v546 = vpop.f32.mrb[0].mxu0
  %547 = vmatprep.mubr.bf16.mxu0 0
  %548 = vmatmul.mubr.bf16.gmra.mrb[0].mxu0 %v335
  %v549 = vpop.f32.mrb[0].mxu0
  %v550 = vadd.f32 0.0, %v549
  %v551 = vpop.f32.mrb[0].mxu0
  %v552 = vpop.f32.mrb[0].mxu0
  %v553 = vadd.f32 0.0, %v552
  %v554 = vpop.f32.mrb[0].mxu0
  %555 = vmatprep.mubr.bf16.mxu0 0
  %556 = vmatmul.mubr.bf16.gmra.mrb[0].mxu0 %v338
  %v557 = vpop.f32.mrb[0].mxu0
  %v558 = vadd.f32 0.0, %v557
  %v559 = vpop.f32.mrb[0].mxu0
  %v560 = vpop.f32.mrb[0].mxu0
  %v561 = vadd.f32 0.0, %v560
  %v562 = vpop.f32.mrb[0].mxu0
  %563 = vmatprep.mubr.bf16.mxu0 0
  %564 = vmatmul.mubr.bf16.gmra.mrb[0].mxu0 %v341
  %v565 = vpop.f32.mrb[0].mxu0
  %v566 = vadd.f32 0.0, %v565
  %v567 = vpop.f32.mrb[0].mxu0
  %v568 = vpop.f32.mrb[0].mxu0
  %v569 = vadd.f32 0.0, %v568
  %v570 = vpop.f32.mrb[0].mxu0
  %571 = vmatprep.mubr.bf16.mxu0 0
  %572 = vmatmul.mubr.bf16.gmra.mrb[0].mxu0 %v344
  %v573 = vpop.f32.mrb[0].mxu0
  %v574 = vadd.f32 0.0, %v573
  %v575 = vpop.f32.mrb[0].mxu0
  %v576 = vpop.f32.mrb[0].mxu0
  %v577 = vadd.f32 0.0, %v576
  %v578 = vpop.f32.mrb[0].mxu0
  %579 = vmatprep.mubr.bf16.mxu0 0
  %580 = vmatmul.mubr.bf16.gmra.mrb[0].mxu0 %v347
  %v581 = vpop.f32.mrb[0].mxu0
  %v582 = vadd.f32 0.0, %v581
  %v583 = vpop.f32.mrb[0].mxu0
  %v584 = vpop.f32.mrb[0].mxu0
  %v585 = vadd.f32 0.0, %v584
  %v586 = vpop.f32.mrb[0].mxu0
  %587 = vmatprep.mubr.bf16.mxu0 0
  %588 = vmatmul.mubr.bf16.gmra.mrb[0].mxu0 %v350
  %v589 = vpop.f32.mrb[0].mxu0
  %v590 = vadd.f32 0.0, %v589
  %v591 = vpop.f32.mrb[0].mxu0
  %v592 = vpop.f32.mrb[0].mxu0
  %v593 = vadd.f32 0.0, %v592
  %v594 = vpop.f32.mrb[0].mxu0
  %595 = vmatprep.mubr.bf16.mxu0 0
  %596 = vmatmul.mubr.bf16.gmra.mrb[0].mxu0 %v353
  %v597 = vpop.f32.mrb[0].mxu0
  %v598 = vadd.f32 0.0, %v597
  %v599 = vpop.f32.mrb[0].mxu0
  %v600 = vpop.f32.mrb[0].mxu0
  %v601 = vadd.f32 0.0, %v600
  %v602 = vpop.f32.mrb[0].mxu0
  %603 = vmatprep.mubr.bf16.mxu0 0
  %604 = vmatmul.mubr.bf16.gmra.mrb[0].mxu0 %v356
  %v605 = vpop.f32.mrb[0].mxu0
  %v606 = vadd.f32 0.0, %v605
  %v607 = vpop.f32.mrb[0].mxu0
  %v608 = vpop.f32.mrb[0].mxu0
  %v609 = vadd.f32 0.0, %v608
  %v610 = vpop.f32.mrb[0].mxu0
  %611 = vmatprep.mubr.bf16.mxu0 0
  %612 = vmatmul.mubr.bf16.gmra.mrb[0].mxu0 %v359
  %v613 = vpop.f32.mrb[0].mxu0
  %v614 = vadd.f32 0.0, %v613
  %v615 = vpop.f32.mrb[0].mxu0
  %v616 = vpop.f32.mrb[0].mxu0
  %v617 = vadd.f32 0.0, %v616
  %v618 = vpop.f32.mrb[0].mxu0
  %619 = vmatprep.mubr.bf16.mxu0 0
  %620 = vmatmul.mubr.bf16.gmra.mrb[0].mxu0 %v362
  %v621 = vpop.f32.mrb[0].mxu0
  %v622 = vadd.f32 0.0, %v621
  %v623 = vpop.f32.mrb[0].mxu0
  %v624 = vpop.f32.mrb[0].mxu0
  %v625 = vadd.f32 0.0, %v624
  %v626 = vpop.f32.mrb[0].mxu0
  %627 = vmatprep.mubr.bf16.mxu0 0
  %628 = vmatmul.mubr.bf16.gmra.mrb[0].mxu0 %v365
  %v629 = vpop.f32.mrb[0].mxu0
  %v630 = vadd.f32 0.0, %v629
  %v631 = vpop.f32.mrb[0].mxu0
  %v632 = vpop.f32.mrb[0].mxu0
  %v633 = vadd.f32 0.0, %v632
  %v634 = vpop.f32.mrb[0].mxu0
  %635 = vmatprep.mubr.bf16.mxu0 0
  %636 = vmatmul.mubr.bf16.gmra.mrb[0].mxu0 %v368
  %v637 = vpop.f32.mrb[0].mxu0
  %v638 = vadd.f32 0.0, %v637
  %v639 = vpop.f32.mrb[0].mxu0
  %v640 = vpop.f32.mrb[0].mxu0
  %v641 = vadd.f32 0.0, %v640
  %v642 = vpop.f32.mrb[0].mxu0
  %643 = vmatprep.mubr.bf16.mxu0 0
  %644 = vmatmul.mubr.bf16.gmra.mrb[0].mxu0 %v371
  %v645 = vpop.f32.mrb[0].mxu0
  %v646 = vadd.f32 0.0, %v645
  %v647 = vpop.f32.mrb[0].mxu0
  %v648 = vpop.f32.mrb[0].mxu0
  %v649 = vadd.f32 0.0, %v648
  %v650 = vpop.f32.mrb[0].mxu0
  %651 = vmatprep.mubr.bf16.mxu0 0
  %652 = vmatmul.mubr.bf16.gmra.mrb[0].mxu0 %v374
  %v653 = vpop.f32.mrb[0].mxu0
  %v654 = vadd.f32 0.0, %v653
  %v655 = vpop.f32.mrb[0].mxu0
  %v656 = vpop.f32.mrb[0].mxu0
  %v657 = vadd.f32 0.0, %v656
  %v658 = vpop.f32.mrb[0].mxu0
  %659 = vmatprep.mubr.bf16.mxu0 0
  %660 = vmatmul.mubr.bf16.gmra.mrb[0].mxu0 %v377
  %v661 = vpop.f32.mrb[0].mxu0
  %v662 = vadd.f32 0.0, %v661
  %v663 = vpop.f32.mrb[0].mxu0
  %v664 = vpop.f32.mrb[0].mxu0
  %v665 = vadd.f32 0.0, %v664
  %v666 = vpop.f32.mrb[0].mxu0
  %667 = vdwg.mxu0
  %v669 = vlaneseq
  %v670 = vshrl.u32 %v669, 7
  %v671 = vsub.s32 0, %v670
  %v672 = vrot.slane %v46, %v671
  %v674 = vmul.f32 %v414, %v672
  %v675 = vmul.f32 %v417, %v672
  %v676 = vmul.f32 %v422, %v672
  %v677 = vmul.f32 %v425, %v672
  %v678 = vmul.f32 %v430, %v672
  %v679 = vmul.f32 %v433, %v672
  %v680 = vmul.f32 %v438, %v672
  %v681 = vmul.f32 %v441, %v672
  %v682 = vmul.f32 %v446, %v672
  %v683 = vmul.f32 %v449, %v672
  %v684 = vmul.f32 %v454, %v672
  %v685 = vmul.f32 %v457, %v672
  %v686 = vmul.f32 %v462, %v672
  %v687 = vmul.f32 %v465, %v672
  %v688 = vmul.f32 %v470, %v672
  %v689 = vmul.f32 %v473, %v672
  %v690 = vmul.f32 %v478, %v672
  %v691 = vmul.f32 %v481, %v672
  %v692 = vmul.f32 %v486, %v672
  %v693 = vmul.f32 %v489, %v672
  %v694 = vmul.f32 %v494, %v672
  %v695 = vmul.f32 %v497, %v672
  %v696 = vmul.f32 %v502, %v672
  %v697 = vmul.f32 %v505, %v672
  %v698 = vmul.f32 %v510, %v672
  %v699 = vmul.f32 %v513, %v672
  %v700 = vmul.f32 %v518, %v672
  %v701 = vmul.f32 %v521, %v672
  %v702 = vmul.f32 %v526, %v672
  %v703 = vmul.f32 %v529, %v672
  %v704 = vmul.f32 %v534, %v672
  %v705 = vmul.f32 %v537, %v672
  %v706 = vmul.f32 %v542, %v672
  %v707 = vmul.f32 %v545, %v672
  %v708 = vmul.f32 %v550, %v672
  %v709 = vmul.f32 %v553, %v672
  %v710 = vmul.f32 %v558, %v672
  %v711 = vmul.f32 %v561, %v672
  %v712 = vmul.f32 %v566, %v672
  %v713 = vmul.f32 %v569, %v672
  %v714 = vmul.f32 %v574, %v672
  %v715 = vmul.f32 %v577, %v672
  %v716 = vmul.f32 %v582, %v672
  %v717 = vmul.f32 %v585, %v672
  %v718 = vmul.f32 %v590, %v672
  %v719 = vmul.f32 %v593, %v672
  %v720 = vmul.f32 %v598, %v672
  %v721 = vmul.f32 %v601, %v672
  %v722 = vmul.f32 %v606, %v672
  %v723 = vmul.f32 %v609, %v672
  %v724 = vmul.f32 %v614, %v672
  %v725 = vmul.f32 %v617, %v672
  %v726 = vmul.f32 %v622, %v672
  %v727 = vmul.f32 %v625, %v672
  %v728 = vmul.f32 %v630, %v672
  %v729 = vmul.f32 %v633, %v672
  %v730 = vmul.f32 %v638, %v672
  %v731 = vmul.f32 %v641, %v672
  %v732 = vmul.f32 %v646, %v672
  %v733 = vmul.f32 %v649, %v672
  %v734 = vmul.f32 %v654, %v672
  %v735 = vmul.f32 %v657, %v672
  %v736 = vmul.f32 %v662, %v672
  %v737 = vmul.f32 %v665, %v672
  %v739 = vlaneseq
  %v740 = vshrl.u32 %v739, 7
  %v741 = vsub.s32 0, %v740
  %v742 = vrot.slane %v49, %v741
  %v744 = vadd.f32 %v674, %v742
  %v745 = vadd.f32 %v675, %v742
  %v746 = vadd.f32 %v676, %v742
  %v747 = vadd.f32 %v677, %v742
  %v748 = vadd.f32 %v678, %v742
  %v749 = vadd.f32 %v679, %v742
  %v750 = vadd.f32 %v680, %v742
  %v751 = vadd.f32 %v681, %v742
  %v752 = vadd.f32 %v682, %v742
  %v753 = vadd.f32 %v683, %v742
  %v754 = vadd.f32 %v684, %v742
  %v755 = vadd.f32 %v685, %v742
  %v756 = vadd.f32 %v686, %v742
  %v757 = vadd.f32 %v687, %v742
  %v758 = vadd.f32 %v688, %v742
  %v759 = vadd.f32 %v689, %v742
  %v760 = vadd.f32 %v690, %v742
  %v761 = vadd.f32 %v691, %v742
  %v762 = vadd.f32 %v692, %v742
  %v763 = vadd.f32 %v693, %v742
  %v764 = vadd.f32 %v694, %v742
  %v765 = vadd.f32 %v695, %v742
  %v766 = vadd.f32 %v696, %v742
  %v767 = vadd.f32 %v697, %v742
  %v768 = vadd.f32 %v698, %v742
  %v769 = vadd.f32 %v699, %v742
  %v770 = vadd.f32 %v700, %v742
  %v771 = vadd.f32 %v701, %v742
  %v772 = vadd.f32 %v702, %v742
  %v773 = vadd.f32 %v703, %v742
  %v774 = vadd.f32 %v704, %v742
  %v775 = vadd.f32 %v705, %v742
  %v776 = vadd.f32 %v706, %v742
  %v777 = vadd.f32 %v707, %v742
  %v778 = vadd.f32 %v708, %v742
  %v779 = vadd.f32 %v709, %v742
  %v780 = vadd.f32 %v710, %v742
  %v781 = vadd.f32 %v711, %v742
  %v782 = vadd.f32 %v712, %v742
  %v783 = vadd.f32 %v713, %v742
  %v784 = vadd.f32 %v714, %v742
  %v785 = vadd.f32 %v715, %v742
  %v786 = vadd.f32 %v716, %v742
  %v787 = vadd.f32 %v717, %v742
  %v788 = vadd.f32 %v718, %v742
  %v789 = vadd.f32 %v719, %v742
  %v790 = vadd.f32 %v720, %v742
  %v791 = vadd.f32 %v721, %v742
  %v792 = vadd.f32 %v722, %v742
  %v793 = vadd.f32 %v723, %v742
  %v794 = vadd.f32 %v724, %v742
  %v795 = vadd.f32 %v725, %v742
  %v796 = vadd.f32 %v726, %v742
  %v797 = vadd.f32 %v727, %v742
  %v798 = vadd.f32 %v728, %v742
  %v799 = vadd.f32 %v729, %v742
  %v800 = vadd.f32 %v730, %v742
  %v801 = vadd.f32 %v731, %v742
  %v802 = vadd.f32 %v732, %v742
  %v803 = vadd.f32 %v733, %v742
  %v804 = vadd.f32 %v734, %v742
  %v805 = vadd.f32 %v735, %v742
  %v806 = vadd.f32 %v736, %v742
  %v807 = vadd.f32 %v737, %v742
  %808 = vst [vmem:[%s6] sm:$0xff] %v744
  %809 = vst [vmem:[%s6 + $0x8] sm:$0xff] %v745
  %810 = vst [vmem:[%s6 + $0x10] sm:$0xff] %v746
  %811 = vst [vmem:[%s6 + $0x18] sm:$0xff] %v747
  %812 = vst [vmem:[%s6 + $0x20] sm:$0xff] %v748
  %813 = vst [vmem:[%s6 + $0x28] sm:$0xff] %v749
  %814 = vst [vmem:[%s6 + $0x30] sm:$0xff] %v750
  %815 = vst [vmem:[%s6 + $0x38] sm:$0xff] %v751
  %816 = vst [vmem:[%s6 + $0x40] sm:$0xff] %v752
  %817 = vst [vmem:[%s6 + $0x48] sm:$0xff] %v753
  %818 = vst [vmem:[%s6 + $0x50] sm:$0xff] %v754
  %819 = vst [vmem:[%s6 + $0x58] sm:$0xff] %v755
  %820 = vst [vmem:[%s6 + $0x60] sm:$0xff] %v756
  %821 = vst [vmem:[%s6 + $0x68] sm:$0xff] %v757
  %822 = vst [vmem:[%s6 + $0x70] sm:$0xff] %v758
  %823 = vst [vmem:[%s6 + $0x78] sm:$0xff] %v759
  %824 = vst [vmem:[%s6 + $0x80] sm:$0xff] %v760
  %825 = vst [vmem:[%s6 + $0x88] sm:$0xff] %v761
  %826 = vst [vmem:[%s6 + $0x90] sm:$0xff] %v762
  %827 = vst [vmem:[%s6 + $0x98] sm:$0xff] %v763
  %828 = vst [vmem:[%s6 + $0xa0] sm:$0xff] %v764
  %829 = vst [vmem:[%s6 + $0xa8] sm:$0xff] %v765
  %830 = vst [vmem:[%s6 + $0xb0] sm:$0xff] %v766
  %831 = vst [vmem:[%s6 + $0xb8] sm:$0xff] %v767
  %832 = vst [vmem:[%s6 + $0xc0] sm:$0xff] %v768
  %833 = vst [vmem:[%s6 + $0xc8] sm:$0xff] %v769
  %834 = vst [vmem:[%s6 + $0xd0] sm:$0xff] %v770
  %835 = vst [vmem:[%s6 + $0xd8] sm:$0xff] %v771
  %836 = vst [vmem:[%s6 + $0xe0] sm:$0xff] %v772
  %837 = vst [vmem:[%s6 + $0xe8] sm:$0xff] %v773
  %838 = vst [vmem:[%s6 + $0xf0] sm:$0xff] %v774
  %839 = vst [vmem:[%s6 + $0xf8] sm:$0xff] %v775
  %840 = vst [vmem:[%s6 + $0x100] sm:$0xff] %v776
  %841 = vst [vmem:[%s6 + $0x108] sm:$0xff] %v777
  %842 = vst [vmem:[%s6 + $0x110] sm:$0xff] %v778
  %843 = vst [vmem:[%s6 + $0x118] sm:$0xff] %v779
  %844 = vst [vmem:[%s6 + $0x120] sm:$0xff] %v780
  %845 = vst [vmem:[%s6 + $0x128] sm:$0xff] %v781
  %846 = vst [vmem:[%s6 + $0x130] sm:$0xff] %v782
  %847 = vst [vmem:[%s6 + $0x138] sm:$0xff] %v783
  %848 = vst [vmem:[%s6 + $0x140] sm:$0xff] %v784
  %849 = vst [vmem:[%s6 + $0x148] sm:$0xff] %v785
  %850 = vst [vmem:[%s6 + $0x150] sm:$0xff] %v786
  %851 = vst [vmem:[%s6 + $0x158] sm:$0xff] %v787
  %852 = vst [vmem:[%s6 + $0x160] sm:$0xff] %v788
  %853 = vst [vmem:[%s6 + $0x168] sm:$0xff] %v789
  %854 = vst [vmem:[%s6 + $0x170] sm:$0xff] %v790
  %855 = vst [vmem:[%s6 + $0x178] sm:$0xff] %v791
  %856 = vst [vmem:[%s6 + $0x180] sm:$0xff] %v792
  %857 = vst [vmem:[%s6 + $0x188] sm:$0xff] %v793
  %858 = vst [vmem:[%s6 + $0x190] sm:$0xff] %v794
  %859 = vst [vmem:[%s6 + $0x198] sm:$0xff] %v795
  %860 = vst [vmem:[%s6 + $0x1a0] sm:$0xff] %v796
  %861 = vst [vmem:[%s6 + $0x1a8] sm:$0xff] %v797
  %862 = vst [vmem:[%s6 + $0x1b0] sm:$0xff] %v798
  %863 = vst [vmem:[%s6 + $0x1b8] sm:$0xff] %v799
  %864 = vst [vmem:[%s6 + $0x1c0] sm:$0xff] %v800
  %865 = vst [vmem:[%s6 + $0x1c8] sm:$0xff] %v801
  %866 = vst [vmem:[%s6 + $0x1d0] sm:$0xff] %v802
  %867 = vst [vmem:[%s6 + $0x1d8] sm:$0xff] %v803
  %868 = vst [vmem:[%s6 + $0x1e0] sm:$0xff] %v804
  %869 = vst [vmem:[%s6 + $0x1e8] sm:$0xff] %v805
  %870 = vst [vmem:[%s6 + $0x1f0] sm:$0xff] %v806
  %871 = vst [vmem:[%s6 + $0x1f8] sm:$0xff] %v807
  // Predicated region
  $region26: #{conv_block_forward.3} parent=0 // pred_check
    _
  $region27: #{conv_block_forward.3} parent=0 // pred_check_branch
    %873 = sbr.rel (0) target = $region29
  $region28: #{conv_block_forward.3} parent=0 // pred_region
    _
  $region29: #{conv_block_forward.3} parent=0 // pred_fallthru
    _
  // Predicated region
  $region30: #{conv_block_forward.3} parent=0 // pred_check
    _
  $region31: #{conv_block_forward.3} parent=0 // pred_check_branch
    %875 = sbr.rel (0) target = $region33
  $region32: #{conv_block_forward.3} parent=0 // pred_region
    _
  $region33: #{conv_block_forward.3} parent=0 // pred_fallthru
    _

</llo_original>
